<compile_context>
chip_gen: v5e
topology: v5e:2x2
jax: 0.10.0
libtpu: 0.0.40
codegen_flags: <defaults>
</compile_context>

<pallas_src>
import jax
import jax.numpy as jnp
from jax.experimental import pallas as pl
from jax.experimental.pallas import tpu as pltpu


# ---------------------------------------------------------------------------
# Kernel
# ---------------------------------------------------------------------------
def _head_kernel(x_ref, w1_ref, b1_ref, w2_ref, b2_ref, o_ref):
    # x_ref: (TB, C, HW) in the original channel-major layout (no transpose).
    hw = x_ref.shape[-1]
    # Adaptive avg-pool to (1,1): reduce the spatial (last) axis, fold 1/HW.
    # Accumulate in f32 even if x is streamed as bf16 upstream.
    pooled = jnp.sum(x_ref[...].astype(jnp.float32), axis=-1) * jnp.float32(1.0 / hw)

    # fc1 + ReLU: bf16 MXU operands, f32 accumulation.
    h = jnp.dot(pooled.astype(jnp.bfloat16), w1_ref[...],
                preferred_element_type=jnp.float32)            # (TB, hidden)
    h = jnp.maximum(h + b1_ref[...], 0.0)

    # Dropout(0.5): identity in eval/inference mode.
    # TODO(synk): training-mode dropout (pltpu.prng_seed + prng_random_bits mask).

    out = jnp.dot(h.astype(jnp.bfloat16), w2_ref[...],
                  preferred_element_type=jnp.float32)          # (TB, nc_pad)
    o_ref[...] = (out + b2_ref[...]).astype(o_ref.dtype)


# ---------------------------------------------------------------------------
# Generation-aware sizing helpers
# ---------------------------------------------------------------------------
def _vmem_capacity_bytes():
    """Physical per-core VMEM; conservative default if the query fails."""
    try:
        return int(pltpu.get_tpu_info().vmem_capacity_bytes)
    except Exception:
        return 64 << 20  # v7x per-TC is the smallest of the supported gens


def _pick_batch_tile(batch, per_sample_bytes, weight_bytes, vmem_cap):
    """Choose (TB, padded_B).

    TB is the largest tile whose double-buffered activations + resident
    weights + headroom fit ~65% of physical VMEM, capped at 256 rows.
    Awkward batch sizes are handled by padding B to a multiple of TB
    (the caller pads x and slices the output), never by a whole-batch block.
    """
    headroom = 4 << 20
    budget = int(0.65 * vmem_cap) - weight_bytes - headroom
    cap = max(8, min(256, budget // max(1, 2 * per_sample_bytes)))
    cap -= cap % 8  # keep candidate tiles sublane-aligned
    cap = max(cap, 8)

    if batch <= cap:
        return batch, batch                 # single step; block == full dim is legal

    # Prefer a multiple-of-8 divisor of B (no padding, no wasted HBM traffic).
    for tb in range(cap, 7, -8):
        if batch % tb == 0:
            return tb, batch

    # Awkward batch: pad up to a multiple of the cap (extra traffic <= cap-1 rows).
    pad_b = ((batch + cap - 1) // cap) * cap
    return cap, pad_b


# ---------------------------------------------------------------------------
# One-time parameter preparation (hoisted out of the per-call path)
# ---------------------------------------------------------------------------
def prepare_head_params(w1, b1, w2, b2):
    """Cast/pad weights once at init.  Returns a dict consumed by
    classification_head(); do NOT call this per forward pass."""
    c, hidden = w1.shape
    _, num_classes = w2.shape
    nc_pad = ((num_classes + 127) // 128) * 128   # lane-dense output width

    w1_bf = w1.astype(jnp.bfloat16)                                    # (C, hidden)
    w2_bf = jnp.zeros((hidden, nc_pad), jnp.bfloat16).at[:, :num_classes].set(
        w2.astype(jnp.bfloat16))                                       # (hidden, nc_pad)
    b1_2d = b1.reshape(1, hidden).astype(jnp.float32)
    b2_2d = jnp.zeros((1, nc_pad), jnp.float32).at[:, :num_classes].set(
        b2.astype(jnp.float32))

    return {
        "w1": w1_bf, "b1": b1_2d, "w2": w2_bf, "b2": b2_2d,
        "hidden": hidden, "num_classes": num_classes, "nc_pad": nc_pad,
    }


# ---------------------------------------------------------------------------
# Forward wrapper
# ---------------------------------------------------------------------------
def classification_head(x_nchw, params):
    """x_nchw: (B, 512, H, W) float32 (or bf16 if produced upstream).
    Returns logits (B, num_classes) float32."""
    B, C, H, W = x_nchw.shape
    HW = H * W
    hidden = params["hidden"]
    num_classes = params["num_classes"]
    nc_pad = params["nc_pad"]

    # (B, C, H, W) -> (B, C, HW): pure reshape, NO transpose / extra HBM pass.
    x = x_nchw.reshape(B, C, HW)

    x_elem_bytes = jnp.dtype(x.dtype).itemsize
    per_sample_bytes = C * HW * x_elem_bytes + nc_pad * 4
    weight_bytes = (C * hidden + hidden * nc_pad) * 2 + (hidden + nc_pad) * 4
    vmem_cap = _vmem_capacity_bytes()

    TB, B_pad = _pick_batch_tile(B, per_sample_bytes, weight_bytes, vmem_cap)
    if B_pad != B:
        # Awkward batch size: pad rows (zeros) and slice the output back.
        x = jnp.pad(x, ((0, B_pad - B), (0, 0), (0, 0)))
    grid = (B_pad // TB,)

    # VMEM budget: double-buffered x/out tiles + resident weights + headroom,
    # capped at ~70% of the physical per-core VMEM of this generation.
    x_tile_bytes = TB * C * HW * x_elem_bytes
    out_tile_bytes = TB * nc_pad * 4
    vmem_bytes = 2 * (x_tile_bytes + out_tile_bytes) + weight_bytes + (4 << 20)
    vmem_bytes = int(min(max(vmem_bytes, 16 << 20), int(0.7 * vmem_cap)))

    out_pad = pl.pallas_call(
        _head_kernel,
        out_shape=jax.ShapeDtypeStruct((B_pad, nc_pad), jnp.float32),
        grid=grid,
        in_specs=[
            pl.BlockSpec((TB, C, HW), lambda i: (i, 0, 0)),
            pl.BlockSpec((C, hidden), lambda i: (0, 0)),      # resident weights
            pl.BlockSpec((1, hidden), lambda i: (0, 0)),
            pl.BlockSpec((hidden, nc_pad), lambda i: (0, 0)),
            pl.BlockSpec((1, nc_pad), lambda i: (0, 0)),
        ],
        out_specs=pl.BlockSpec((TB, nc_pad), lambda i: (i, 0)),
        compiler_params=pltpu.CompilerParams(
            dimension_semantics=("parallel",),   # batch tiles across v7x's 2 TCs
            vmem_limit_bytes=vmem_bytes,
        ),
    )(x, params["w1"], params["b1"], params["w2"], params["b2"])

    return out_pad[:B, :num_classes]


# ---------------------------------------------------------------------------
# Demo / correctness check
# ---------------------------------------------------------------------------
if __name__ == "__main__":
    key = jax.random.PRNGKey(0)
    k_x, k_w1, k_b1, k_w2, k_b2 = jax.random.split(key, 5)

    B, C, H, W = 2, 512, 8, 8          # channel dim fixed at 512 by the module
    HIDDEN, NUM_CLASSES = 768, 10

    x = jax.random.normal(k_x, (B, C, H, W), dtype=jnp.float32)
    # Deterministic synthetic parameters (PyTorch-like small uniform init).
    w1 = jax.random.uniform(k_w1, (C, HIDDEN), jnp.float32, -0.04, 0.04)
    b1 = jax.random.uniform(k_b1, (HIDDEN,), jnp.float32, -0.04, 0.04)
    w2 = jax.random.uniform(k_w2, (HIDDEN, NUM_CLASSES), jnp.float32, -0.03, 0.03)
    b2 = jax.random.uniform(k_b2, (NUM_CLASSES,), jnp.float32, -0.03, 0.03)

    # One-time parameter prep (hoisted out of the per-call path).
    params = prepare_head_params(w1, b1, w2, b2)
    params = jax.block_until_ready(params)

    out = classification_head(x, params)
    out = jax.block_until_ready(out)

    # Pure-JAX f32 reference (eval-mode dropout == identity).
    pooled_ref = jnp.mean(x, axis=(2, 3))                     # (B, 512)
    h_ref = jnp.maximum(pooled_ref @ w1 + b1, 0.0)
    ref = h_ref @ w2 + b2

    assert out.shape == (B, NUM_CLASSES)
    # bf16 MXU operands with f32 accumulation -> slightly looser tolerance
    # vs. the pure-f32 reference.
    max_err = float(jnp.max(jnp.abs(out - ref)))
    assert jnp.allclose(out, ref, atol=1e-2, rtol=1e-2), max_err

    print("KERNEL_OK")
</pallas_src>

<mosaic_0001>
module attributes {stable_mosaic.version = 11 : i64} {
  func.func @_head_kernel(%arg0: i32, %arg1: memref<2x512x64xf32, #tpu.memory_space<vmem>>, %arg2: memref<512x768xbf16, #tpu.memory_space<vmem>>, %arg3: memref<1x768xf32, #tpu.memory_space<vmem>>, %arg4: memref<768x128xbf16, #tpu.memory_space<vmem>>, %arg5: memref<1x128xf32, #tpu.memory_space<vmem>>, %arg6: memref<2x128xf32, #tpu.memory_space<vmem>>) attributes {dimension_semantics = [#tpu.dimension_semantics<parallel>], iteration_bounds = array<i64: 1>, scalar_prefetch = 0 : i64, scratch_operands = 0 : i64, tpu.core_type = #tpu.core_type<tc>, window_params = [{transform_indices = @transform_0, window_bounds = array<i64: 2, 512, 64>}, {pipeline_mode = #tpu.pipeline_mode<synchronous>, transform_indices = @transform_1, window_bounds = array<i64: 512, 768>}, {pipeline_mode = #tpu.pipeline_mode<synchronous>, transform_indices = @transform_2, window_bounds = array<i64: 1, 768>}, {pipeline_mode = #tpu.pipeline_mode<synchronous>, transform_indices = @transform_3, window_bounds = array<i64: 768, 128>}, {pipeline_mode = #tpu.pipeline_mode<synchronous>, transform_indices = @transform_4, window_bounds = array<i64: 1, 128>}, {transform_indices = @transform_5, window_bounds = array<i64: 2, 128>}]} {
    %c0 = arith.constant 0 : index
    %c0_0 = arith.constant 0 : index
    %c0_1 = arith.constant 0 : index
    %0 = vector.load %arg1[%c0, %c0_0, %c0_1] : memref<2x512x64xf32, #tpu.memory_space<vmem>>, vector<2x512x64xf32>
    %cst = arith.constant dense<0.000000e+00> : vector<2x512xf32>
    %1 = vector.multi_reduction <add>, %0, %cst [2] : vector<2x512x64xf32> to vector<2x512xf32>
    %cst_2 = arith.constant 1.562500e-02 : f32
    %2 = vector.broadcast %cst_2 : f32 to vector<2x512xf32>
    %3 = arith.mulf %1, %2 : vector<2x512xf32>
    %4 = arith.truncf %3 : vector<2x512xf32> to vector<2x512xbf16>
    %c0_3 = arith.constant 0 : index
    %c0_4 = arith.constant 0 : index
    %5 = vector.load %arg2[%c0_3, %c0_4] : memref<512x768xbf16, #tpu.memory_space<vmem>>, vector<512x768xbf16>
    %cst_5 = arith.constant dense<0.000000e+00> : vector<2x768xf32>
    %6 = tpu.matmul %4, %5, %cst_5 {dimension_numbers = #tpu.dot_dimension_numbers<[1], [0], [0], [1], [0, 0, 1, 1], [], []>} : vector<2x512xbf16>, vector<512x768xbf16>, vector<2x768xf32> -> vector<2x768xf32>
    %c0_6 = arith.constant 0 : index
    %c0_7 = arith.constant 0 : index
    %7 = vector.load %arg3[%c0_6, %c0_7] : memref<1x768xf32, #tpu.memory_space<vmem>>, vector<1x768xf32>
    %8 = vector.broadcast %7 : vector<1x768xf32> to vector<2x768xf32>
    %9 = arith.addf %6, %8 : vector<2x768xf32>
    %cst_8 = arith.constant 0.000000e+00 : f32
    %10 = vector.broadcast %cst_8 : f32 to vector<2x768xf32>
    %11 = arith.maximumf %9, %10 : vector<2x768xf32>
    %12 = arith.truncf %11 : vector<2x768xf32> to vector<2x768xbf16>
    %c0_9 = arith.constant 0 : index
    %c0_10 = arith.constant 0 : index
    %13 = vector.load %arg4[%c0_9, %c0_10] : memref<768x128xbf16, #tpu.memory_space<vmem>>, vector<768x128xbf16>
    %cst_11 = arith.constant dense<0.000000e+00> : vector<2x128xf32>
    %14 = tpu.matmul %12, %13, %cst_11 {dimension_numbers = #tpu.dot_dimension_numbers<[1], [0], [0], [1], [0, 0, 1, 1], [], []>} : vector<2x768xbf16>, vector<768x128xbf16>, vector<2x128xf32> -> vector<2x128xf32>
    %c0_12 = arith.constant 0 : index
    %c0_13 = arith.constant 0 : index
    %15 = vector.load %arg5[%c0_12, %c0_13] : memref<1x128xf32, #tpu.memory_space<vmem>>, vector<1x128xf32>
    %16 = vector.broadcast %15 : vector<1x128xf32> to vector<2x128xf32>
    %17 = arith.addf %14, %16 : vector<2x128xf32>
    %c0_14 = arith.constant 0 : index
    %c0_15 = arith.constant 0 : index
    %18 = vector.load %arg6[%c0_14, %c0_15] : memref<2x128xf32, #tpu.memory_space<vmem>>, vector<2x128xf32>
    tpu.vector_store %arg6[%c0_14, %c0_15], %17 {strides = array<i32>} : memref<2x128xf32, #tpu.memory_space<vmem>>, vector<2x128xf32>,
    return
  }
  func.func @transform_0(%arg0: i32) -> (i32, i32, i32) {
    %c0_i32 = arith.constant 0 : i32
    %c0_i32_0 = arith.constant 0 : i32
    %c0_i32_1 = arith.constant 0 : i32
    return %arg0, %c0_i32, %c0_i32_0 : i32, i32, i32
  }
  func.func @transform_1(%arg0: i32) -> (i32, i32) {
    %c0_i32 = arith.constant 0 : i32
    %c0_i32_0 = arith.constant 0 : i32
    %c0_i32_1 = arith.constant 0 : i32
    return %c0_i32, %c0_i32_0 : i32, i32
  }
  func.func @transform_2(%arg0: i32) -> (i32, i32) {
    %c0_i32 = arith.constant 0 : i32
    %c0_i32_0 = arith.constant 0 : i32
    %c0_i32_1 = arith.constant 0 : i32
    return %c0_i32, %c0_i32_0 : i32, i32
  }
  func.func @transform_3(%arg0: i32) -> (i32, i32) {
    %c0_i32 = arith.constant 0 : i32
    %c0_i32_0 = arith.constant 0 : i32
    %c0_i32_1 = arith.constant 0 : i32
    return %c0_i32, %c0_i32_0 : i32, i32
  }
  func.func @transform_4(%arg0: i32) -> (i32, i32) {
    %c0_i32 = arith.constant 0 : i32
    %c0_i32_0 = arith.constant 0 : i32
    %c0_i32_1 = arith.constant 0 : i32
    return %c0_i32, %c0_i32_0 : i32, i32
  }
  func.func @transform_5(%arg0: i32) -> (i32, i32) {
    %c0_i32 = arith.constant 0 : i32
    %c0_i32_0 = arith.constant 0 : i32
    return %arg0, %c0_i32 : i32, i32
  }
}

</mosaic_0001>

<llo_original>
// kernel: tpu_custom_call.1
$region0: #{tpu_custom_call.1}
  #allocation0 [shape = 'u32[]', space=smem, size = 0x4, offset = 0x4, fixed_abs, tag = 'smem constant byte address 0x4 - core index']
  #allocation1 [shape = 'u32[72,128]{1,0:T(1,128)}', space=vmem, size = 0x9000, scoped, tag = 'internal scratch']
  %s0 = inlined_call_operand.vmem [shape: f32[2,512,64], index: 0, kind: input, shape index: {}]
  %s1 = inlined_call_operand.vmem [shape: bf16[512,768], index: 1, kind: input, shape index: {}]
  %s2 = inlined_call_operand.hbm [shape: f32[1,768], index: 2, kind: input, shape index: {}]
  %s3 = inlined_call_operand.hbm [shape: bf16[768,128], index: 3, kind: input, shape index: {}]
  %s4 = inlined_call_operand.hbm [shape: f32[1,128], index: 4, kind: input, shape index: {}]
  %s5 = inlined_call_operand.hbm [shape: f32[2,128], index: 5, kind: output, shape index: {}]
  %s6 = sld [smem:[#allocation0]]
  $region42: #{tpu_custom_call.1} parent=0
    _
  %s8 = ssub.s32 1, %s6
  %s9 = scalar_select 0, %s8, %s6
  $region1: #{tpu_custom_call.1} parent=0
    #allocation2 [shape = 'u8[3072]{0}', space=vmem, size = 0xc00, scoped, tag = 'input window, operand 2, single buffered']
    #allocation3 [shape = 's32[1]{0}', space=sflag, size = 0x4, scoped, tag = 'scoped memory for tpu_custom_call.1']
    #allocation4 [shape = 's32[1]{0}', space=sflag, size = 0x4, scoped, tag = 'scoped memory for tpu_custom_call.1']
    #allocation5 [shape = 'u8[196608]{0}', space=vmem, size = 0x30000, scoped, tag = 'input window, operand 3, single buffered']
    #allocation6 [shape = 's32[1]{0}', space=sflag, size = 0x4, scoped, tag = 'scoped memory for tpu_custom_call.1']
    #allocation7 [shape = 'u8[512]{0}', space=vmem, size = 0x400, scoped, tag = 'input window, operand 4, single buffered']
    #allocation8 [shape = 'u8[1024]{0}', space=vmem, size = 0x400, scoped, tag = 'output window, operand 0, single buffered']
    %10 = vsyncpa [#allocation3], 0
    %11 = vsyncpa [#allocation6], 0
    %12 = vsyncpa [#allocation4], 0
    // Predicated region
    $region2: #{tpu_custom_call.1} parent=1 // pred_check
      _
    $region3: #{tpu_custom_call.1} parent=1 // pred_check_branch
      %14 = sbr.rel (0) target = $region5
    $region4: #{tpu_custom_call.1} parent=1 // pred_region
      _
    $region5: #{tpu_custom_call.1} parent=1 // pred_fallthru
      _
    // Predicated region
    $region6: #{tpu_custom_call.1} parent=1 // pred_check
      _
    $region7: #{tpu_custom_call.1} parent=1 // pred_check_branch
      %16 = sbr.rel (0) target = $region9
    $region8: #{tpu_custom_call.1} parent=1 // pred_region
      _
    $region9: #{tpu_custom_call.1} parent=1 // pred_fallthru
      _
    // Predicated region
    $region10: #{tpu_custom_call.1} parent=1 // pred_check
      _
    $region11: #{tpu_custom_call.1} parent=1 // pred_check_branch
      %18 = sbr.rel (0) target = $region13
    $region12: #{tpu_custom_call.1} parent=1 // pred_region
      %20 = vsyncadd [#allocation3], 0
      %s22 = sshll.u32 %s2, 4
      %s23 = int_to_ptr.hbm [resolvable:$true] %s22
      %s24 = sshll.u32 [#allocation2], 4
      %s25 = int_to_ptr.vmem [resolvable:$true] %s24
      %27 = dma.hbm_to_vmem [thread:$0]  %s23, 96, %s25, [#allocation3]
    $region13: #{tpu_custom_call.1} parent=1 // pred_fallthru
      _
    // Predicated region
    $region14: #{tpu_custom_call.1} parent=1 // pred_check
      _
    $region15: #{tpu_custom_call.1} parent=1 // pred_check_branch
      %29 = sbr.rel (0) target = $region17
    $region16: #{tpu_custom_call.1} parent=1 // pred_region
      %31 = vsyncadd [#allocation6], 0
      %s32 = sshll.u32 %s3, 4
      %s33 = int_to_ptr.hbm [resolvable:$true] %s32
      %s34 = sshll.u32 [#allocation5], 4
      %s35 = int_to_ptr.vmem [resolvable:$true] %s34
      %40 = dma.hbm_to_vmem [thread:$0]  %s33, 6144, %s35, [#allocation6], 64, 64, 4
    $region17: #{tpu_custom_call.1} parent=1 // pred_fallthru
      _
    // Predicated region
    $region18: #{tpu_custom_call.1} parent=1 // pred_check
      _
    $region19: #{tpu_custom_call.1} parent=1 // pred_check_branch
      %42 = sbr.rel (0) target = $region21
    $region20: #{tpu_custom_call.1} parent=1 // pred_region
      %44 = vsyncadd [#allocation6], 0
      %s46 = sshll.u32 %s4, 4
      %s47 = int_to_ptr.hbm [resolvable:$true] %s46
      %s48 = sshll.u32 [#allocation7], 4
      %s49 = int_to_ptr.vmem [resolvable:$true] %s48
      %51 = dma.hbm_to_vmem [thread:$0]  %s47, 16, %s49, [#allocation6]
    $region21: #{tpu_custom_call.1} parent=1 // pred_fallthru
      _
    // Predicated region
    $region22: #{tpu_custom_call.1} parent=1 // pred_check
      _
    $region23: #{tpu_custom_call.1} parent=1 // pred_check_branch
      %53 = sbr.rel (0) target = $region25
    $region24: #{tpu_custom_call.1} parent=1 // pred_region
      %55 = dma.done [#allocation3], 96
    $region25: #{tpu_custom_call.1} parent=1 // pred_fallthru
      _
    // Predicated region
    $region26: #{tpu_custom_call.1} parent=1 // pred_check
      _
    $region27: #{tpu_custom_call.1} parent=1 // pred_check_branch
      %57 = sbr.rel (0) target = $region29
    $region28: #{tpu_custom_call.1} parent=1 // pred_region
      %59 = dma.done [#allocation6], 6144
    $region29: #{tpu_custom_call.1} parent=1 // pred_fallthru
      _
    // Predicated region
    $region30: #{tpu_custom_call.1} parent=1 // pred_check
      _
    $region31: #{tpu_custom_call.1} parent=1 // pred_check_branch
      %61 = sbr.rel (0) target = $region33
    $region32: #{tpu_custom_call.1} parent=1 // pred_region
      %63 = dma.done [#allocation6], 16
    $region33: #{tpu_custom_call.1} parent=1 // pred_fallthru
      _
    %v64 = vld [vmem:[%s0] sm:$0xff]
    %v65 = vld [vmem:[%s0 + $0x8] sm:$0xff]
    %v66 = vld [vmem:[%s0 + $0x10] sm:$0xff]
    %v67 = vld [vmem:[%s0 + $0x18] sm:$0xff]
    %v68 = vld [vmem:[%s0 + $0x20] sm:$0xff]
    %v69 = vld [vmem:[%s0 + $0x28] sm:$0xff]
    %v70 = vld [vmem:[%s0 + $0x30] sm:$0xff]
    %v71 = vld [vmem:[%s0 + $0x38] sm:$0xff]
    %v72 = vld [vmem:[%s0 + $0x40] sm:$0xff]
    %v73 = vld [vmem:[%s0 + $0x48] sm:$0xff]
    %v74 = vld [vmem:[%s0 + $0x50] sm:$0xff]
    %v75 = vld [vmem:[%s0 + $0x58] sm:$0xff]
    %v76 = vld [vmem:[%s0 + $0x60] sm:$0xff]
    %v77 = vld [vmem:[%s0 + $0x68] sm:$0xff]
    %v78 = vld [vmem:[%s0 + $0x70] sm:$0xff]
    %v79 = vld [vmem:[%s0 + $0x78] sm:$0xff]
    %v80 = vld [vmem:[%s0 + $0x80] sm:$0xff]
    %v81 = vld [vmem:[%s0 + $0x88] sm:$0xff]
    %v82 = vld [vmem:[%s0 + $0x90] sm:$0xff]
    %v83 = vld [vmem:[%s0 + $0x98] sm:$0xff]
    %v84 = vld [vmem:[%s0 + $0xa0] sm:$0xff]
    %v85 = vld [vmem:[%s0 + $0xa8] sm:$0xff]
    %v86 = vld [vmem:[%s0 + $0xb0] sm:$0xff]
    %v87 = vld [vmem:[%s0 + $0xb8] sm:$0xff]
    %v88 = vld [vmem:[%s0 + $0xc0] sm:$0xff]
    %v89 = vld [vmem:[%s0 + $0xc8] sm:$0xff]
    %v90 = vld [vmem:[%s0 + $0xd0] sm:$0xff]
    %v91 = vld [vmem:[%s0 + $0xd8] sm:$0xff]
    %v92 = vld [vmem:[%s0 + $0xe0] sm:$0xff]
    %v93 = vld [vmem:[%s0 + $0xe8] sm:$0xff]
    %v94 = vld [vmem:[%s0 + $0xf0] sm:$0xff]
    %v95 = vld [vmem:[%s0 + $0xf8] sm:$0xff]
    %v96 = vld [vmem:[%s0 + $0x100] sm:$0xff]
    %v97 = vld [vmem:[%s0 + $0x108] sm:$0xff]
    %v98 = vld [vmem:[%s0 + $0x110] sm:$0xff]
    %v99 = vld [vmem:[%s0 + $0x118] sm:$0xff]
    %v100 = vld [vmem:[%s0 + $0x120] sm:$0xff]
    %v101 = vld [vmem:[%s0 + $0x128] sm:$0xff]
    %v102 = vld [vmem:[%s0 + $0x130] sm:$0xff]
    %v103 = vld [vmem:[%s0 + $0x138] sm:$0xff]
    %v104 = vld [vmem:[%s0 + $0x140] sm:$0xff]
    %v105 = vld [vmem:[%s0 + $0x148] sm:$0xff]
    %v106 = vld [vmem:[%s0 + $0x150] sm:$0xff]
    %v107 = vld [vmem:[%s0 + $0x158] sm:$0xff]
    %v108 = vld [vmem:[%s0 + $0x160] sm:$0xff]
    %v109 = vld [vmem:[%s0 + $0x168] sm:$0xff]
    %v110 = vld [vmem:[%s0 + $0x170] sm:$0xff]
    %v111 = vld [vmem:[%s0 + $0x178] sm:$0xff]
    %v112 = vld [vmem:[%s0 + $0x180] sm:$0xff]
    %v113 = vld [vmem:[%s0 + $0x188] sm:$0xff]
    %v114 = vld [vmem:[%s0 + $0x190] sm:$0xff]
    %v115 = vld [vmem:[%s0 + $0x198] sm:$0xff]
    %v116 = vld [vmem:[%s0 + $0x1a0] sm:$0xff]
    %v117 = vld [vmem:[%s0 + $0x1a8] sm:$0xff]
    %v118 = vld [vmem:[%s0 + $0x1b0] sm:$0xff]
    %v119 = vld [vmem:[%s0 + $0x1b8] sm:$0xff]
    %v120 = vld [vmem:[%s0 + $0x1c0] sm:$0xff]
    %v121 = vld [vmem:[%s0 + $0x1c8] sm:$0xff]
    %v122 = vld [vmem:[%s0 + $0x1d0] sm:$0xff]
    %v123 = vld [vmem:[%s0 + $0x1d8] sm:$0xff]
    %v124 = vld [vmem:[%s0 + $0x1e0] sm:$0xff]
    %v125 = vld [vmem:[%s0 + $0x1e8] sm:$0xff]
    %v126 = vld [vmem:[%s0 + $0x1f0] sm:$0xff]
    %v127 = vld [vmem:[%s0 + $0x1f8] sm:$0xff]
    %v128 = vld [vmem:[%s0 + $0x200] sm:$0xff]
    %v129 = vld [vmem:[%s0 + $0x208] sm:$0xff]
    %v130 = vld [vmem:[%s0 + $0x210] sm:$0xff]
    %v131 = vld [vmem:[%s0 + $0x218] sm:$0xff]
    %v132 = vld [vmem:[%s0 + $0x220] sm:$0xff]
    %v133 = vld [vmem:[%s0 + $0x228] sm:$0xff]
    %v134 = vld [vmem:[%s0 + $0x230] sm:$0xff]
    %v135 = vld [vmem:[%s0 + $0x238] sm:$0xff]
    %v136 = vld [vmem:[%s0 + $0x240] sm:$0xff]
    %v137 = vld [vmem:[%s0 + $0x248] sm:$0xff]
    %v138 = vld [vmem:[%s0 + $0x250] sm:$0xff]
    %v139 = vld [vmem:[%s0 + $0x258] sm:$0xff]
    %v140 = vld [vmem:[%s0 + $0x260] sm:$0xff]
    %v141 = vld [vmem:[%s0 + $0x268] sm:$0xff]
    %v142 = vld [vmem:[%s0 + $0x270] sm:$0xff]
    %v143 = vld [vmem:[%s0 + $0x278] sm:$0xff]
    %v144 = vld [vmem:[%s0 + $0x280] sm:$0xff]
    %v145 = vld [vmem:[%s0 + $0x288] sm:$0xff]
    %v146 = vld [vmem:[%s0 + $0x290] sm:$0xff]
    %v147 = vld [vmem:[%s0 + $0x298] sm:$0xff]
    %v148 = vld [vmem:[%s0 + $0x2a0] sm:$0xff]
    %v149 = vld [vmem:[%s0 + $0x2a8] sm:$0xff]
    %v150 = vld [vmem:[%s0 + $0x2b0] sm:$0xff]
    %v151 = vld [vmem:[%s0 + $0x2b8] sm:$0xff]
    %v152 = vld [vmem:[%s0 + $0x2c0] sm:$0xff]
    %v153 = vld [vmem:[%s0 + $0x2c8] sm:$0xff]
    %v154 = vld [vmem:[%s0 + $0x2d0] sm:$0xff]
    %v155 = vld [vmem:[%s0 + $0x2d8] sm:$0xff]
    %v156 = vld [vmem:[%s0 + $0x2e0] sm:$0xff]
    %v157 = vld [vmem:[%s0 + $0x2e8] sm:$0xff]
    %v158 = vld [vmem:[%s0 + $0x2f0] sm:$0xff]
    %v159 = vld [vmem:[%s0 + $0x2f8] sm:$0xff]
    %v160 = vld [vmem:[%s0 + $0x300] sm:$0xff]
    %v161 = vld [vmem:[%s0 + $0x308] sm:$0xff]
    %v162 = vld [vmem:[%s0 + $0x310] sm:$0xff]
    %v163 = vld [vmem:[%s0 + $0x318] sm:$0xff]
    %v164 = vld [vmem:[%s0 + $0x320] sm:$0xff]
    %v165 = vld [vmem:[%s0 + $0x328] sm:$0xff]
    %v166 = vld [vmem:[%s0 + $0x330] sm:$0xff]
    %v167 = vld [vmem:[%s0 + $0x338] sm:$0xff]
    %v168 = vld [vmem:[%s0 + $0x340] sm:$0xff]
    %v169 = vld [vmem:[%s0 + $0x348] sm:$0xff]
    %v170 = vld [vmem:[%s0 + $0x350] sm:$0xff]
    %v171 = vld [vmem:[%s0 + $0x358] sm:$0xff]
    %v172 = vld [vmem:[%s0 + $0x360] sm:$0xff]
    %v173 = vld [vmem:[%s0 + $0x368] sm:$0xff]
    %v174 = vld [vmem:[%s0 + $0x370] sm:$0xff]
    %v175 = vld [vmem:[%s0 + $0x378] sm:$0xff]
    %v176 = vld [vmem:[%s0 + $0x380] sm:$0xff]
    %v177 = vld [vmem:[%s0 + $0x388] sm:$0xff]
    %v178 = vld [vmem:[%s0 + $0x390] sm:$0xff]
    %v179 = vld [vmem:[%s0 + $0x398] sm:$0xff]
    %v180 = vld [vmem:[%s0 + $0x3a0] sm:$0xff]
    %v181 = vld [vmem:[%s0 + $0x3a8] sm:$0xff]
    %v182 = vld [vmem:[%s0 + $0x3b0] sm:$0xff]
    %v183 = vld [vmem:[%s0 + $0x3b8] sm:$0xff]
    %v184 = vld [vmem:[%s0 + $0x3c0] sm:$0xff]
    %v185 = vld [vmem:[%s0 + $0x3c8] sm:$0xff]
    %v186 = vld [vmem:[%s0 + $0x3d0] sm:$0xff]
    %v187 = vld [vmem:[%s0 + $0x3d8] sm:$0xff]
    %v188 = vld [vmem:[%s0 + $0x3e0] sm:$0xff]
    %v189 = vld [vmem:[%s0 + $0x3e8] sm:$0xff]
    %v190 = vld [vmem:[%s0 + $0x3f0] sm:$0xff]
    %v191 = vld [vmem:[%s0 + $0x3f8] sm:$0xff]
    %vm192 = vcmask 523264
    %v193 = vsel %vm192, %v64, 0.0
    %194 = vadd.xlane.f32.xlu0 %v193
    %v195 = vpop.xlane.xlu0 %194
    %v196 = vsel %vm192, %v65, 0.0
    %197 = vadd.xlane.f32.xlu0 %v196
    %v198 = vpop.xlane.xlu0 %197
    %v199 = vsel %vm192, %v66, 0.0
    %200 = vadd.xlane.f32.xlu0 %v199
    %v201 = vpop.xlane.xlu0 %200
    %v202 = vsel %vm192, %v67, 0.0
    %203 = vadd.xlane.f32.xlu0 %v202
    %v204 = vpop.xlane.xlu0 %203
    %v205 = vsel %vm192, %v68, 0.0
    %206 = vadd.xlane.f32.xlu0 %v205
    %v207 = vpop.xlane.xlu0 %206
    %v208 = vsel %vm192, %v69, 0.0
    %209 = vadd.xlane.f32.xlu0 %v208
    %v210 = vpop.xlane.xlu0 %209
    %v211 = vsel %vm192, %v70, 0.0
    %212 = vadd.xlane.f32.xlu0 %v211
    %v213 = vpop.xlane.xlu0 %212
    %v214 = vsel %vm192, %v71, 0.0
    %215 = vadd.xlane.f32.xlu0 %v214
    %v216 = vpop.xlane.xlu0 %215
    %v217 = vsel %vm192, %v72, 0.0
    %218 = vadd.xlane.f32.xlu0 %v217
    %v219 = vpop.xlane.xlu0 %218
    %v220 = vsel %vm192, %v73, 0.0
    %221 = vadd.xlane.f32.xlu0 %v220
    %v222 = vpop.xlane.xlu0 %221
    %v223 = vsel %vm192, %v74, 0.0
    %224 = vadd.xlane.f32.xlu0 %v223
    %v225 = vpop.xlane.xlu0 %224
    %v226 = vsel %vm192, %v75, 0.0
    %227 = vadd.xlane.f32.xlu0 %v226
    %v228 = vpop.xlane.xlu0 %227
    %v229 = vsel %vm192, %v76, 0.0
    %230 = vadd.xlane.f32.xlu0 %v229
    %v231 = vpop.xlane.xlu0 %230
    %v232 = vsel %vm192, %v77, 0.0
    %233 = vadd.xlane.f32.xlu0 %v232
    %v234 = vpop.xlane.xlu0 %233
    %v235 = vsel %vm192, %v78, 0.0
    %236 = vadd.xlane.f32.xlu0 %v235
    %v237 = vpop.xlane.xlu0 %236
    %v238 = vsel %vm192, %v79, 0.0
    %239 = vadd.xlane.f32.xlu0 %v238
    %v240 = vpop.xlane.xlu0 %239
    %v241 = vsel %vm192, %v80, 0.0
    %242 = vadd.xlane.f32.xlu0 %v241
    %v243 = vpop.xlane.xlu0 %242
    %v244 = vsel %vm192, %v81, 0.0
    %245 = vadd.xlane.f32.xlu0 %v244
    %v246 = vpop.xlane.xlu0 %245
    %v247 = vsel %vm192, %v82, 0.0
    %248 = vadd.xlane.f32.xlu0 %v247
    %v249 = vpop.xlane.xlu0 %248
    %v250 = vsel %vm192, %v83, 0.0
    %251 = vadd.xlane.f32.xlu0 %v250
    %v252 = vpop.xlane.xlu0 %251
    %v253 = vsel %vm192, %v84, 0.0
    %254 = vadd.xlane.f32.xlu0 %v253
    %v255 = vpop.xlane.xlu0 %254
    %v256 = vsel %vm192, %v85, 0.0
    %257 = vadd.xlane.f32.xlu0 %v256
    %v258 = vpop.xlane.xlu0 %257
    %v259 = vsel %vm192, %v86, 0.0
    %260 = vadd.xlane.f32.xlu0 %v259
    %v261 = vpop.xlane.xlu0 %260
    %v262 = vsel %vm192, %v87, 0.0
    %263 = vadd.xlane.f32.xlu0 %v262
    %v264 = vpop.xlane.xlu0 %263
    %v265 = vsel %vm192, %v88, 0.0
    %266 = vadd.xlane.f32.xlu0 %v265
    %v267 = vpop.xlane.xlu0 %266
    %v268 = vsel %vm192, %v89, 0.0
    %269 = vadd.xlane.f32.xlu0 %v268
    %v270 = vpop.xlane.xlu0 %269
    %v271 = vsel %vm192, %v90, 0.0
    %272 = vadd.xlane.f32.xlu0 %v271
    %v273 = vpop.xlane.xlu0 %272
    %v274 = vsel %vm192, %v91, 0.0
    %275 = vadd.xlane.f32.xlu0 %v274
    %v276 = vpop.xlane.xlu0 %275
    %v277 = vsel %vm192, %v92, 0.0
    %278 = vadd.xlane.f32.xlu0 %v277
    %v279 = vpop.xlane.xlu0 %278
    %v280 = vsel %vm192, %v93, 0.0
    %281 = vadd.xlane.f32.xlu0 %v280
    %v282 = vpop.xlane.xlu0 %281
    %v283 = vsel %vm192, %v94, 0.0
    %284 = vadd.xlane.f32.xlu0 %v283
    %v285 = vpop.xlane.xlu0 %284
    %v286 = vsel %vm192, %v95, 0.0
    %287 = vadd.xlane.f32.xlu0 %v286
    %v288 = vpop.xlane.xlu0 %287
    %v289 = vsel %vm192, %v96, 0.0
    %290 = vadd.xlane.f32.xlu0 %v289
    %v291 = vpop.xlane.xlu0 %290
    %v292 = vsel %vm192, %v97, 0.0
    %293 = vadd.xlane.f32.xlu0 %v292
    %v294 = vpop.xlane.xlu0 %293
    %v295 = vsel %vm192, %v98, 0.0
    %296 = vadd.xlane.f32.xlu0 %v295
    %v297 = vpop.xlane.xlu0 %296
    %v298 = vsel %vm192, %v99, 0.0
    %299 = vadd.xlane.f32.xlu0 %v298
    %v300 = vpop.xlane.xlu0 %299
    %v301 = vsel %vm192, %v100, 0.0
    %302 = vadd.xlane.f32.xlu0 %v301
    %v303 = vpop.xlane.xlu0 %302
    %v304 = vsel %vm192, %v101, 0.0
    %305 = vadd.xlane.f32.xlu0 %v304
    %v306 = vpop.xlane.xlu0 %305
    %v307 = vsel %vm192, %v102, 0.0
    %308 = vadd.xlane.f32.xlu0 %v307
    %v309 = vpop.xlane.xlu0 %308
    %v310 = vsel %vm192, %v103, 0.0
    %311 = vadd.xlane.f32.xlu0 %v310
    %v312 = vpop.xlane.xlu0 %311
    %v313 = vsel %vm192, %v104, 0.0
    %314 = vadd.xlane.f32.xlu0 %v313
    %v315 = vpop.xlane.xlu0 %314
    %v316 = vsel %vm192, %v105, 0.0
    %317 = vadd.xlane.f32.xlu0 %v316
    %v318 = vpop.xlane.xlu0 %317
    %v319 = vsel %vm192, %v106, 0.0
    %320 = vadd.xlane.f32.xlu0 %v319
    %v321 = vpop.xlane.xlu0 %320
    %v322 = vsel %vm192, %v107, 0.0
    %323 = vadd.xlane.f32.xlu0 %v322
    %v324 = vpop.xlane.xlu0 %323
    %v325 = vsel %vm192, %v108, 0.0
    %326 = vadd.xlane.f32.xlu0 %v325
    %v327 = vpop.xlane.xlu0 %326
    %v328 = vsel %vm192, %v109, 0.0
    %329 = vadd.xlane.f32.xlu0 %v328
    %v330 = vpop.xlane.xlu0 %329
    %v331 = vsel %vm192, %v110, 0.0
    %332 = vadd.xlane.f32.xlu0 %v331
    %v333 = vpop.xlane.xlu0 %332
    %v334 = vsel %vm192, %v111, 0.0
    %335 = vadd.xlane.f32.xlu0 %v334
    %v336 = vpop.xlane.xlu0 %335
    %v337 = vsel %vm192, %v112, 0.0
    %338 = vadd.xlane.f32.xlu0 %v337
    %v339 = vpop.xlane.xlu0 %338
    %v340 = vsel %vm192, %v113, 0.0
    %341 = vadd.xlane.f32.xlu0 %v340
    %v342 = vpop.xlane.xlu0 %341
    %v343 = vsel %vm192, %v114, 0.0
    %344 = vadd.xlane.f32.xlu0 %v343
    %v345 = vpop.xlane.xlu0 %344
    %v346 = vsel %vm192, %v115, 0.0
    %347 = vadd.xlane.f32.xlu0 %v346
    %v348 = vpop.xlane.xlu0 %347
    %v349 = vsel %vm192, %v116, 0.0
    %350 = vadd.xlane.f32.xlu0 %v349
    %v351 = vpop.xlane.xlu0 %350
    %v352 = vsel %vm192, %v117, 0.0
    %353 = vadd.xlane.f32.xlu0 %v352
    %v354 = vpop.xlane.xlu0 %353
    %v355 = vsel %vm192, %v118, 0.0
    %356 = vadd.xlane.f32.xlu0 %v355
    %v357 = vpop.xlane.xlu0 %356
    %v358 = vsel %vm192, %v119, 0.0
    %359 = vadd.xlane.f32.xlu0 %v358
    %v360 = vpop.xlane.xlu0 %359
    %v361 = vsel %vm192, %v120, 0.0
    %362 = vadd.xlane.f32.xlu0 %v361
    %v363 = vpop.xlane.xlu0 %362
    %v364 = vsel %vm192, %v121, 0.0
    %365 = vadd.xlane.f32.xlu0 %v364
    %v366 = vpop.xlane.xlu0 %365
    %v367 = vsel %vm192, %v122, 0.0
    %368 = vadd.xlane.f32.xlu0 %v367
    %v369 = vpop.xlane.xlu0 %368
    %v370 = vsel %vm192, %v123, 0.0
    %371 = vadd.xlane.f32.xlu0 %v370
    %v372 = vpop.xlane.xlu0 %371
    %v373 = vsel %vm192, %v124, 0.0
    %374 = vadd.xlane.f32.xlu0 %v373
    %v375 = vpop.xlane.xlu0 %374
    %v376 = vsel %vm192, %v125, 0.0
    %377 = vadd.xlane.f32.xlu0 %v376
    %v378 = vpop.xlane.xlu0 %377
    %v379 = vsel %vm192, %v126, 0.0
    %380 = vadd.xlane.f32.xlu0 %v379
    %v381 = vpop.xlane.xlu0 %380
    %v382 = vsel %vm192, %v127, 0.0
    %383 = vadd.xlane.f32.xlu0 %v382
    %v384 = vpop.xlane.xlu0 %383
    %v385 = vsel %vm192, %v128, 0.0
    %386 = vadd.xlane.f32.xlu0 %v385
    %v387 = vpop.xlane.xlu0 %386
    %v388 = vsel %vm192, %v129, 0.0
    %389 = vadd.xlane.f32.xlu0 %v388
    %v390 = vpop.xlane.xlu0 %389
    %v391 = vsel %vm192, %v130, 0.0
    %392 = vadd.xlane.f32.xlu0 %v391
    %v393 = vpop.xlane.xlu0 %392
    %v394 = vsel %vm192, %v131, 0.0
    %395 = vadd.xlane.f32.xlu0 %v394
    %v396 = vpop.xlane.xlu0 %395
    %v397 = vsel %vm192, %v132, 0.0
    %398 = vadd.xlane.f32.xlu0 %v397
    %v399 = vpop.xlane.xlu0 %398
    %v400 = vsel %vm192, %v133, 0.0
    %401 = vadd.xlane.f32.xlu0 %v400
    %v402 = vpop.xlane.xlu0 %401
    %v403 = vsel %vm192, %v134, 0.0
    %404 = vadd.xlane.f32.xlu0 %v403
    %v405 = vpop.xlane.xlu0 %404
    %v406 = vsel %vm192, %v135, 0.0
    %407 = vadd.xlane.f32.xlu0 %v406
    %v408 = vpop.xlane.xlu0 %407
    %v409 = vsel %vm192, %v136, 0.0
    %410 = vadd.xlane.f32.xlu0 %v409
    %v411 = vpop.xlane.xlu0 %410
    %v412 = vsel %vm192, %v137, 0.0
    %413 = vadd.xlane.f32.xlu0 %v412
    %v414 = vpop.xlane.xlu0 %413
    %v415 = vsel %vm192, %v138, 0.0
    %416 = vadd.xlane.f32.xlu0 %v415
    %v417 = vpop.xlane.xlu0 %416
    %v418 = vsel %vm192, %v139, 0.0
    %419 = vadd.xlane.f32.xlu0 %v418
    %v420 = vpop.xlane.xlu0 %419
    %v421 = vsel %vm192, %v140, 0.0
    %422 = vadd.xlane.f32.xlu0 %v421
    %v423 = vpop.xlane.xlu0 %422
    %v424 = vsel %vm192, %v141, 0.0
    %425 = vadd.xlane.f32.xlu0 %v424
    %v426 = vpop.xlane.xlu0 %425
    %v427 = vsel %vm192, %v142, 0.0
    %428 = vadd.xlane.f32.xlu0 %v427
    %v429 = vpop.xlane.xlu0 %428
    %v430 = vsel %vm192, %v143, 0.0
    %431 = vadd.xlane.f32.xlu0 %v430
    %v432 = vpop.xlane.xlu0 %431
    %v433 = vsel %vm192, %v144, 0.0
    %434 = vadd.xlane.f32.xlu0 %v433
    %v435 = vpop.xlane.xlu0 %434
    %v436 = vsel %vm192, %v145, 0.0
    %437 = vadd.xlane.f32.xlu0 %v436
    %v438 = vpop.xlane.xlu0 %437
    %v439 = vsel %vm192, %v146, 0.0
    %440 = vadd.xlane.f32.xlu0 %v439
    %v441 = vpop.xlane.xlu0 %440
    %v442 = vsel %vm192, %v147, 0.0
    %443 = vadd.xlane.f32.xlu0 %v442
    %v444 = vpop.xlane.xlu0 %443
    %v445 = vsel %vm192, %v148, 0.0
    %446 = vadd.xlane.f32.xlu0 %v445
    %v447 = vpop.xlane.xlu0 %446
    %v448 = vsel %vm192, %v149, 0.0
    %449 = vadd.xlane.f32.xlu0 %v448
    %v450 = vpop.xlane.xlu0 %449
    %v451 = vsel %vm192, %v150, 0.0
    %452 = vadd.xlane.f32.xlu0 %v451
    %v453 = vpop.xlane.xlu0 %452
    %v454 = vsel %vm192, %v151, 0.0
    %455 = vadd.xlane.f32.xlu0 %v454
    %v456 = vpop.xlane.xlu0 %455
    %v457 = vsel %vm192, %v152, 0.0
    %458 = vadd.xlane.f32.xlu0 %v457
    %v459 = vpop.xlane.xlu0 %458
    %v460 = vsel %vm192, %v153, 0.0
    %461 = vadd.xlane.f32.xlu0 %v460
    %v462 = vpop.xlane.xlu0 %461
    %v463 = vsel %vm192, %v154, 0.0
    %464 = vadd.xlane.f32.xlu0 %v463
    %v465 = vpop.xlane.xlu0 %464
    %v466 = vsel %vm192, %v155, 0.0
    %467 = vadd.xlane.f32.xlu0 %v466
    %v468 = vpop.xlane.xlu0 %467
    %v469 = vsel %vm192, %v156, 0.0
    %470 = vadd.xlane.f32.xlu0 %v469
    %v471 = vpop.xlane.xlu0 %470
    %v472 = vsel %vm192, %v157, 0.0
    %473 = vadd.xlane.f32.xlu0 %v472
    %v474 = vpop.xlane.xlu0 %473
    %v475 = vsel %vm192, %v158, 0.0
    %476 = vadd.xlane.f32.xlu0 %v475
    %v477 = vpop.xlane.xlu0 %476
    %v478 = vsel %vm192, %v159, 0.0
    %479 = vadd.xlane.f32.xlu0 %v478
    %v480 = vpop.xlane.xlu0 %479
    %v481 = vsel %vm192, %v160, 0.0
    %482 = vadd.xlane.f32.xlu0 %v481
    %v483 = vpop.xlane.xlu0 %482
    %v484 = vsel %vm192, %v161, 0.0
    %485 = vadd.xlane.f32.xlu0 %v484
    %v486 = vpop.xlane.xlu0 %485
    %v487 = vsel %vm192, %v162, 0.0
    %488 = vadd.xlane.f32.xlu0 %v487
    %v489 = vpop.xlane.xlu0 %488
    %v490 = vsel %vm192, %v163, 0.0
    %491 = vadd.xlane.f32.xlu0 %v490
    %v492 = vpop.xlane.xlu0 %491
    %v493 = vsel %vm192, %v164, 0.0
    %494 = vadd.xlane.f32.xlu0 %v493
    %v495 = vpop.xlane.xlu0 %494
    %v496 = vsel %vm192, %v165, 0.0
    %497 = vadd.xlane.f32.xlu0 %v496
    %v498 = vpop.xlane.xlu0 %497
    %v499 = vsel %vm192, %v166, 0.0
    %500 = vadd.xlane.f32.xlu0 %v499
    %v501 = vpop.xlane.xlu0 %500
    %v502 = vsel %vm192, %v167, 0.0
    %503 = vadd.xlane.f32.xlu0 %v502
    %v504 = vpop.xlane.xlu0 %503
    %v505 = vsel %vm192, %v168, 0.0
    %506 = vadd.xlane.f32.xlu0 %v505
    %v507 = vpop.xlane.xlu0 %506
    %v508 = vsel %vm192, %v169, 0.0
    %509 = vadd.xlane.f32.xlu0 %v508
    %v510 = vpop.xlane.xlu0 %509
    %v511 = vsel %vm192, %v170, 0.0
    %512 = vadd.xlane.f32.xlu0 %v511
    %v513 = vpop.xlane.xlu0 %512
    %v514 = vsel %vm192, %v171, 0.0
    %515 = vadd.xlane.f32.xlu0 %v514
    %v516 = vpop.xlane.xlu0 %515
    %v517 = vsel %vm192, %v172, 0.0
    %518 = vadd.xlane.f32.xlu0 %v517
    %v519 = vpop.xlane.xlu0 %518
    %v520 = vsel %vm192, %v173, 0.0
    %521 = vadd.xlane.f32.xlu0 %v520
    %v522 = vpop.xlane.xlu0 %521
    %v523 = vsel %vm192, %v174, 0.0
    %524 = vadd.xlane.f32.xlu0 %v523
    %v525 = vpop.xlane.xlu0 %524
    %v526 = vsel %vm192, %v175, 0.0
    %527 = vadd.xlane.f32.xlu0 %v526
    %v528 = vpop.xlane.xlu0 %527
    %v529 = vsel %vm192, %v176, 0.0
    %530 = vadd.xlane.f32.xlu0 %v529
    %v531 = vpop.xlane.xlu0 %530
    %v532 = vsel %vm192, %v177, 0.0
    %533 = vadd.xlane.f32.xlu0 %v532
    %v534 = vpop.xlane.xlu0 %533
    %v535 = vsel %vm192, %v178, 0.0
    %536 = vadd.xlane.f32.xlu0 %v535
    %v537 = vpop.xlane.xlu0 %536
    %v538 = vsel %vm192, %v179, 0.0
    %539 = vadd.xlane.f32.xlu0 %v538
    %v540 = vpop.xlane.xlu0 %539
    %v541 = vsel %vm192, %v180, 0.0
    %542 = vadd.xlane.f32.xlu0 %v541
    %v543 = vpop.xlane.xlu0 %542
    %v544 = vsel %vm192, %v181, 0.0
    %545 = vadd.xlane.f32.xlu0 %v544
    %v546 = vpop.xlane.xlu0 %545
    %v547 = vsel %vm192, %v182, 0.0
    %548 = vadd.xlane.f32.xlu0 %v547
    %v549 = vpop.xlane.xlu0 %548
    %v550 = vsel %vm192, %v183, 0.0
    %551 = vadd.xlane.f32.xlu0 %v550
    %v552 = vpop.xlane.xlu0 %551
    %v553 = vsel %vm192, %v184, 0.0
    %554 = vadd.xlane.f32.xlu0 %v553
    %v555 = vpop.xlane.xlu0 %554
    %v556 = vsel %vm192, %v185, 0.0
    %557 = vadd.xlane.f32.xlu0 %v556
    %v558 = vpop.xlane.xlu0 %557
    %v559 = vsel %vm192, %v186, 0.0
    %560 = vadd.xlane.f32.xlu0 %v559
    %v561 = vpop.xlane.xlu0 %560
    %v562 = vsel %vm192, %v187, 0.0
    %563 = vadd.xlane.f32.xlu0 %v562
    %v564 = vpop.xlane.xlu0 %563
    %v565 = vsel %vm192, %v188, 0.0
    %566 = vadd.xlane.f32.xlu0 %v565
    %v567 = vpop.xlane.xlu0 %566
    %v568 = vsel %vm192, %v189, 0.0
    %569 = vadd.xlane.f32.xlu0 %v568
    %v570 = vpop.xlane.xlu0 %569
    %v571 = vsel %vm192, %v190, 0.0
    %572 = vadd.xlane.f32.xlu0 %v571
    %v573 = vpop.xlane.xlu0 %572
    %v574 = vsel %vm192, %v191, 0.0
    %575 = vadd.xlane.f32.xlu0 %v574
    %v576 = vpop.xlane.xlu0 %575
    %v577 = vmul.f32 %v195, 0.015625
    %v578 = vmul.f32 %v198, 0.015625
    %v579 = vmul.f32 %v201, 0.015625
    %v580 = vmul.f32 %v204, 0.015625
    %v581 = vmul.f32 %v207, 0.015625
    %v582 = vmul.f32 %v210, 0.015625
    %v583 = vmul.f32 %v213, 0.015625
    %v584 = vmul.f32 %v216, 0.015625
    %v585 = vmul.f32 %v219, 0.015625
    %v586 = vmul.f32 %v222, 0.015625
    %v587 = vmul.f32 %v225, 0.015625
    %v588 = vmul.f32 %v228, 0.015625
    %v589 = vmul.f32 %v231, 0.015625
    %v590 = vmul.f32 %v234, 0.015625
    %v591 = vmul.f32 %v237, 0.015625
    %v592 = vmul.f32 %v240, 0.015625
    %v593 = vmul.f32 %v243, 0.015625
    %v594 = vmul.f32 %v246, 0.015625
    %v595 = vmul.f32 %v249, 0.015625
    %v596 = vmul.f32 %v252, 0.015625
    %v597 = vmul.f32 %v255, 0.015625
    %v598 = vmul.f32 %v258, 0.015625
    %v599 = vmul.f32 %v261, 0.015625
    %v600 = vmul.f32 %v264, 0.015625
    %v601 = vmul.f32 %v267, 0.015625
    %v602 = vmul.f32 %v270, 0.015625
    %v603 = vmul.f32 %v273, 0.015625
    %v604 = vmul.f32 %v276, 0.015625
    %v605 = vmul.f32 %v279, 0.015625
    %v606 = vmul.f32 %v282, 0.015625
    %v607 = vmul.f32 %v285, 0.015625
    %v608 = vmul.f32 %v288, 0.015625
    %v609 = vmul.f32 %v291, 0.015625
    %v610 = vmul.f32 %v294, 0.015625
    %v611 = vmul.f32 %v297, 0.015625
    %v612 = vmul.f32 %v300, 0.015625
    %v613 = vmul.f32 %v303, 0.015625
    %v614 = vmul.f32 %v306, 0.015625
    %v615 = vmul.f32 %v309, 0.015625
    %v616 = vmul.f32 %v312, 0.015625
    %v617 = vmul.f32 %v315, 0.015625
    %v618 = vmul.f32 %v318, 0.015625
    %v619 = vmul.f32 %v321, 0.015625
    %v620 = vmul.f32 %v324, 0.015625
    %v621 = vmul.f32 %v327, 0.015625
    %v622 = vmul.f32 %v330, 0.015625
    %v623 = vmul.f32 %v333, 0.015625
    %v624 = vmul.f32 %v336, 0.015625
    %v625 = vmul.f32 %v339, 0.015625
    %v626 = vmul.f32 %v342, 0.015625
    %v627 = vmul.f32 %v345, 0.015625
    %v628 = vmul.f32 %v348, 0.015625
    %v629 = vmul.f32 %v351, 0.015625
    %v630 = vmul.f32 %v354, 0.015625
    %v631 = vmul.f32 %v357, 0.015625
    %v632 = vmul.f32 %v360, 0.015625
    %v633 = vmul.f32 %v363, 0.015625
    %v634 = vmul.f32 %v366, 0.015625
    %v635 = vmul.f32 %v369, 0.015625
    %v636 = vmul.f32 %v372, 0.015625
    %v637 = vmul.f32 %v375, 0.015625
    %v638 = vmul.f32 %v378, 0.015625
    %v639 = vmul.f32 %v381, 0.015625
    %v640 = vmul.f32 %v384, 0.015625
    %v641 = vmul.f32 %v387, 0.015625
    %v642 = vmul.f32 %v390, 0.015625
    %v643 = vmul.f32 %v393, 0.015625
    %v644 = vmul.f32 %v396, 0.015625
    %v645 = vmul.f32 %v399, 0.015625
    %v646 = vmul.f32 %v402, 0.015625
    %v647 = vmul.f32 %v405, 0.015625
    %v648 = vmul.f32 %v408, 0.015625
    %v649 = vmul.f32 %v411, 0.015625
    %v650 = vmul.f32 %v414, 0.015625
    %v651 = vmul.f32 %v417, 0.015625
    %v652 = vmul.f32 %v420, 0.015625
    %v653 = vmul.f32 %v423, 0.015625
    %v654 = vmul.f32 %v426, 0.015625
    %v655 = vmul.f32 %v429, 0.015625
    %v656 = vmul.f32 %v432, 0.015625
    %v657 = vmul.f32 %v435, 0.015625
    %v658 = vmul.f32 %v438, 0.015625
    %v659 = vmul.f32 %v441, 0.015625
    %v660 = vmul.f32 %v444, 0.015625
    %v661 = vmul.f32 %v447, 0.015625
    %v662 = vmul.f32 %v450, 0.015625
    %v663 = vmul.f32 %v453, 0.015625
    %v664 = vmul.f32 %v456, 0.015625
    %v665 = vmul.f32 %v459, 0.015625
    %v666 = vmul.f32 %v462, 0.015625
    %v667 = vmul.f32 %v465, 0.015625
    %v668 = vmul.f32 %v468, 0.015625
    %v669 = vmul.f32 %v471, 0.015625
    %v670 = vmul.f32 %v474, 0.015625
    %v671 = vmul.f32 %v477, 0.015625
    %v672 = vmul.f32 %v480, 0.015625
    %v673 = vmul.f32 %v483, 0.015625
    %v674 = vmul.f32 %v486, 0.015625
    %v675 = vmul.f32 %v489, 0.015625
    %v676 = vmul.f32 %v492, 0.015625
    %v677 = vmul.f32 %v495, 0.015625
    %v678 = vmul.f32 %v498, 0.015625
    %v679 = vmul.f32 %v501, 0.015625
    %v680 = vmul.f32 %v504, 0.015625
    %v681 = vmul.f32 %v507, 0.015625
    %v682 = vmul.f32 %v510, 0.015625
    %v683 = vmul.f32 %v513, 0.015625
    %v684 = vmul.f32 %v516, 0.015625
    %v685 = vmul.f32 %v519, 0.015625
    %v686 = vmul.f32 %v522, 0.015625
    %v687 = vmul.f32 %v525, 0.015625
    %v688 = vmul.f32 %v528, 0.015625
    %v689 = vmul.f32 %v531, 0.015625
    %v690 = vmul.f32 %v534, 0.015625
    %v691 = vmul.f32 %v537, 0.015625
    %v692 = vmul.f32 %v540, 0.015625
    %v693 = vmul.f32 %v543, 0.015625
    %v694 = vmul.f32 %v546, 0.015625
    %v695 = vmul.f32 %v549, 0.015625
    %v696 = vmul.f32 %v552, 0.015625
    %v697 = vmul.f32 %v555, 0.015625
    %v698 = vmul.f32 %v558, 0.015625
    %v699 = vmul.f32 %v561, 0.015625
    %v700 = vmul.f32 %v564, 0.015625
    %v701 = vmul.f32 %v567, 0.015625
    %v702 = vmul.f32 %v570, 0.015625
    %v703 = vmul.f32 %v573, 0.015625
    %v704 = vmul.f32 %v576, 0.015625
    %v705 = vpack.c.bf16 %v578, %v577
    %v706 = vpack.c.bf16 %v580, %v579
    %v707 = vpack.c.bf16 %v582, %v581
    %v708 = vpack.c.bf16 %v584, %v583
    %v709 = vpack.c.bf16 %v586, %v585
    %v710 = vpack.c.bf16 %v588, %v587
    %v711 = vpack.c.bf16 %v590, %v589
    %v712 = vpack.c.bf16 %v592, %v591
    %v713 = vpack.c.bf16 %v594, %v593
    %v714 = vpack.c.bf16 %v596, %v595
    %v715 = vpack.c.bf16 %v598, %v597
    %v716 = vpack.c.bf16 %v600, %v599
    %v717 = vpack.c.bf16 %v602, %v601
    %v718 = vpack.c.bf16 %v604, %v603
    %v719 = vpack.c.bf16 %v606, %v605
    %v720 = vpack.c.bf16 %v608, %v607
    %v721 = vpack.c.bf16 %v610, %v609
    %v722 = vpack.c.bf16 %v612, %v611
    %v723 = vpack.c.bf16 %v614, %v613
    %v724 = vpack.c.bf16 %v616, %v615
    %v725 = vpack.c.bf16 %v618, %v617
    %v726 = vpack.c.bf16 %v620, %v619
    %v727 = vpack.c.bf16 %v622, %v621
    %v728 = vpack.c.bf16 %v624, %v623
    %v729 = vpack.c.bf16 %v626, %v625
    %v730 = vpack.c.bf16 %v628, %v627
    %v731 = vpack.c.bf16 %v630, %v629
    %v732 = vpack.c.bf16 %v632, %v631
    %v733 = vpack.c.bf16 %v634, %v633
    %v734 = vpack.c.bf16 %v636, %v635
    %v735 = vpack.c.bf16 %v638, %v637
    %v736 = vpack.c.bf16 %v640, %v639
    %v737 = vpack.c.bf16 %v642, %v641
    %v738 = vpack.c.bf16 %v644, %v643
    %v739 = vpack.c.bf16 %v646, %v645
    %v740 = vpack.c.bf16 %v648, %v647
    %v741 = vpack.c.bf16 %v650, %v649
    %v742 = vpack.c.bf16 %v652, %v651
    %v743 = vpack.c.bf16 %v654, %v653
    %v744 = vpack.c.bf16 %v656, %v655
    %v745 = vpack.c.bf16 %v658, %v657
    %v746 = vpack.c.bf16 %v660, %v659
    %v747 = vpack.c.bf16 %v662, %v661
    %v748 = vpack.c.bf16 %v664, %v663
    %v749 = vpack.c.bf16 %v666, %v665
    %v750 = vpack.c.bf16 %v668, %v667
    %v751 = vpack.c.bf16 %v670, %v669
    %v752 = vpack.c.bf16 %v672, %v671
    %v753 = vpack.c.bf16 %v674, %v673
    %v754 = vpack.c.bf16 %v676, %v675
    %v755 = vpack.c.bf16 %v678, %v677
    %v756 = vpack.c.bf16 %v680, %v679
    %v757 = vpack.c.bf16 %v682, %v681
    %v758 = vpack.c.bf16 %v684, %v683
    %v759 = vpack.c.bf16 %v686, %v685
    %v760 = vpack.c.bf16 %v688, %v687
    %v761 = vpack.c.bf16 %v690, %v689
    %v762 = vpack.c.bf16 %v692, %v691
    %v763 = vpack.c.bf16 %v694, %v693
    %v764 = vpack.c.bf16 %v696, %v695
    %v765 = vpack.c.bf16 %v698, %v697
    %v766 = vpack.c.bf16 %v700, %v699
    %v767 = vpack.c.bf16 %v702, %v701
    %v768 = vpack.c.bf16 %v704, %v703
    %v769 = vld [vmem:[%s1] sm:$0xff]
    %v770 = vld [vmem:[%s1 + $0x8] sm:$0xff]
    %v771 = vld [vmem:[%s1 + $0x10] sm:$0xff]
    %v772 = vld [vmem:[%s1 + $0x18] sm:$0xff]
    %v773 = vld [vmem:[%s1 + $0x20] sm:$0xff]
    %v774 = vld [vmem:[%s1 + $0x28] sm:$0xff]
    %v775 = vld [vmem:[%s1 + $0x30] sm:$0xff]
    %v776 = vld [vmem:[%s1 + $0x38] sm:$0xff]
    %v777 = vld [vmem:[%s1 + $0x40] sm:$0xff]
    %v778 = vld [vmem:[%s1 + $0x48] sm:$0xff]
    %v779 = vld [vmem:[%s1 + $0x50] sm:$0xff]
    %v780 = vld [vmem:[%s1 + $0x58] sm:$0xff]
    %v781 = vld [vmem:[%s1 + $0x60] sm:$0xff]
    %v782 = vld [vmem:[%s1 + $0x68] sm:$0xff]
    %v783 = vld [vmem:[%s1 + $0x70] sm:$0xff]
    %v784 = vld [vmem:[%s1 + $0x78] sm:$0xff]
    %v785 = vld [vmem:[%s1 + $0x80] sm:$0xff]
    %v786 = vld [vmem:[%s1 + $0x88] sm:$0xff]
    %v787 = vld [vmem:[%s1 + $0x90] sm:$0xff]
    %v788 = vld [vmem:[%s1 + $0x98] sm:$0xff]
    %v789 = vld [vmem:[%s1 + $0xa0] sm:$0xff]
    %v790 = vld [vmem:[%s1 + $0xa8] sm:$0xff]
    %v791 = vld [vmem:[%s1 + $0xb0] sm:$0xff]
    %v792 = vld [vmem:[%s1 + $0xb8] sm:$0xff]
    %v793 = vld [vmem:[%s1 + $0xc0] sm:$0xff]
    %v794 = vld [vmem:[%s1 + $0xc8] sm:$0xff]
    %v795 = vld [vmem:[%s1 + $0xd0] sm:$0xff]
    %v796 = vld [vmem:[%s1 + $0xd8] sm:$0xff]
    %v797 = vld [vmem:[%s1 + $0xe0] sm:$0xff]
    %v798 = vld [vmem:[%s1 + $0xe8] sm:$0xff]
    %v799 = vld [vmem:[%s1 + $0xf0] sm:$0xff]
    %v800 = vld [vmem:[%s1 + $0xf8] sm:$0xff]
    %v801 = vld [vmem:[%s1 + $0x100] sm:$0xff]
    %v802 = vld [vmem:[%s1 + $0x108] sm:$0xff]
    %v803 = vld [vmem:[%s1 + $0x110] sm:$0xff]
    %v804 = vld [vmem:[%s1 + $0x118] sm:$0xff]
    %v805 = vld [vmem:[%s1 + $0x120] sm:$0xff]
    %v806 = vld [vmem:[%s1 + $0x128] sm:$0xff]
    %v807 = vld [vmem:[%s1 + $0x130] sm:$0xff]
    %v808 = vld [vmem:[%s1 + $0x138] sm:$0xff]
    %v809 = vld [vmem:[%s1 + $0x140] sm:$0xff]
    %v810 = vld [vmem:[%s1 + $0x148] sm:$0xff]
    %v811 = vld [vmem:[%s1 + $0x150] sm:$0xff]
    %v812 = vld [vmem:[%s1 + $0x158] sm:$0xff]
    %v813 = vld [vmem:[%s1 + $0x160] sm:$0xff]
    %v814 = vld [vmem:[%s1 + $0x168] sm:$0xff]
    %v815 = vld [vmem:[%s1 + $0x170] sm:$0xff]
    %v816 = vld [vmem:[%s1 + $0x178] sm:$0xff]
    %v817 = vld [vmem:[%s1 + $0x180] sm:$0xff]
    %v818 = vld [vmem:[%s1 + $0x188] sm:$0xff]
    %v819 = vld [vmem:[%s1 + $0x190] sm:$0xff]
    %v820 = vld [vmem:[%s1 + $0x198] sm:$0xff]
    %v821 = vld [vmem:[%s1 + $0x1a0] sm:$0xff]
    %v822 = vld [vmem:[%s1 + $0x1a8] sm:$0xff]
    %v823 = vld [vmem:[%s1 + $0x1b0] sm:$0xff]
    %v824 = vld [vmem:[%s1 + $0x1b8] sm:$0xff]
    %v825 = vld [vmem:[%s1 + $0x1c0] sm:$0xff]
    %v826 = vld [vmem:[%s1 + $0x1c8] sm:$0xff]
    %v827 = vld [vmem:[%s1 + $0x1d0] sm:$0xff]
    %v828 = vld [vmem:[%s1 + $0x1d8] sm:$0xff]
    %v829 = vld [vmem:[%s1 + $0x1e0] sm:$0xff]
    %v830 = vld [vmem:[%s1 + $0x1e8] sm:$0xff]
    %v831 = vld [vmem:[%s1 + $0x1f0] sm:$0xff]
    %v832 = vld [vmem:[%s1 + $0x1f8] sm:$0xff]
    %v833 = vld [vmem:[%s1 + $0x200] sm:$0xff]
    %v834 = vld [vmem:[%s1 + $0x208] sm:$0xff]
    %v835 = vld [vmem:[%s1 + $0x210] sm:$0xff]
    %v836 = vld [vmem:[%s1 + $0x218] sm:$0xff]
    %v837 = vld [vmem:[%s1 + $0x220] sm:$0xff]
    %v838 = vld [vmem:[%s1 + $0x228] sm:$0xff]
    %v839 = vld [vmem:[%s1 + $0x230] sm:$0xff]
    %v840 = vld [vmem:[%s1 + $0x238] sm:$0xff]
    %v841 = vld [vmem:[%s1 + $0x240] sm:$0xff]
    %v842 = vld [vmem:[%s1 + $0x248] sm:$0xff]
    %v843 = vld [vmem:[%s1 + $0x250] sm:$0xff]
    %v844 = vld [vmem:[%s1 + $0x258] sm:$0xff]
    %v845 = vld [vmem:[%s1 + $0x260] sm:$0xff]
    %v846 = vld [vmem:[%s1 + $0x268] sm:$0xff]
    %v847 = vld [vmem:[%s1 + $0x270] sm:$0xff]
    %v848 = vld [vmem:[%s1 + $0x278] sm:$0xff]
    %v849 = vld [vmem:[%s1 + $0x280] sm:$0xff]
    %v850 = vld [vmem:[%s1 + $0x288] sm:$0xff]
    %v851 = vld [vmem:[%s1 + $0x290] sm:$0xff]
    %v852 = vld [vmem:[%s1 + $0x298] sm:$0xff]
    %v853 = vld [vmem:[%s1 + $0x2a0] sm:$0xff]
    %v854 = vld [vmem:[%s1 + $0x2a8] sm:$0xff]
    %v855 = vld [vmem:[%s1 + $0x2b0] sm:$0xff]
    %v856 = vld [vmem:[%s1 + $0x2b8] sm:$0xff]
    %v857 = vld [vmem:[%s1 + $0x2c0] sm:$0xff]
    %v858 = vld [vmem:[%s1 + $0x2c8] sm:$0xff]
    %v859 = vld [vmem:[%s1 + $0x2d0] sm:$0xff]
    %v860 = vld [vmem:[%s1 + $0x2d8] sm:$0xff]
    %v861 = vld [vmem:[%s1 + $0x2e0] sm:$0xff]
    %v862 = vld [vmem:[%s1 + $0x2e8] sm:$0xff]
    %v863 = vld [vmem:[%s1 + $0x2f0] sm:$0xff]
    %v864 = vld [vmem:[%s1 + $0x2f8] sm:$0xff]
    %v865 = vld [vmem:[%s1 + $0x300] sm:$0xff]
    %v866 = vld [vmem:[%s1 + $0x308] sm:$0xff]
    %v867 = vld [vmem:[%s1 + $0x310] sm:$0xff]
    %v868 = vld [vmem:[%s1 + $0x318] sm:$0xff]
    %v869 = vld [vmem:[%s1 + $0x320] sm:$0xff]
    %v870 = vld [vmem:[%s1 + $0x328] sm:$0xff]
    %v871 = vld [vmem:[%s1 + $0x330] sm:$0xff]
    %v872 = vld [vmem:[%s1 + $0x338] sm:$0xff]
    %v873 = vld [vmem:[%s1 + $0x340] sm:$0xff]
    %v874 = vld [vmem:[%s1 + $0x348] sm:$0xff]
    %v875 = vld [vmem:[%s1 + $0x350] sm:$0xff]
    %v876 = vld [vmem:[%s1 + $0x358] sm:$0xff]
    %v877 = vld [vmem:[%s1 + $0x360] sm:$0xff]
    %v878 = vld [vmem:[%s1 + $0x368] sm:$0xff]
    %v879 = vld [vmem:[%s1 + $0x370] sm:$0xff]
    %v880 = vld [vmem:[%s1 + $0x378] sm:$0xff]
    %v881 = vld [vmem:[%s1 + $0x380] sm:$0xff]
    %v882 = vld [vmem:[%s1 + $0x388] sm:$0xff]
    %v883 = vld [vmem:[%s1 + $0x390] sm:$0xff]
    %v884 = vld [vmem:[%s1 + $0x398] sm:$0xff]
    %v885 = vld [vmem:[%s1 + $0x3a0] sm:$0xff]
    %v886 = vld [vmem:[%s1 + $0x3a8] sm:$0xff]
    %v887 = vld [vmem:[%s1 + $0x3b0] sm:$0xff]
    %v888 = vld [vmem:[%s1 + $0x3b8] sm:$0xff]
    %v889 = vld [vmem:[%s1 + $0x3c0] sm:$0xff]
    %v890 = vld [vmem:[%s1 + $0x3c8] sm:$0xff]
    %v891 = vld [vmem:[%s1 + $0x3d0] sm:$0xff]
    %v892 = vld [vmem:[%s1 + $0x3d8] sm:$0xff]
    %v893 = vld [vmem:[%s1 + $0x3e0] sm:$0xff]
    %v894 = vld [vmem:[%s1 + $0x3e8] sm:$0xff]
    %v895 = vld [vmem:[%s1 + $0x3f0] sm:$0xff]
    %v896 = vld [vmem:[%s1 + $0x3f8] sm:$0xff]
    %v897 = vld [vmem:[%s1 + $0x400] sm:$0xff]
    %v898 = vld [vmem:[%s1 + $0x408] sm:$0xff]
    %v899 = vld [vmem:[%s1 + $0x410] sm:$0xff]
    %v900 = vld [vmem:[%s1 + $0x418] sm:$0xff]
    %v901 = vld [vmem:[%s1 + $0x420] sm:$0xff]
    %v902 = vld [vmem:[%s1 + $0x428] sm:$0xff]
    %v903 = vld [vmem:[%s1 + $0x430] sm:$0xff]
    %v904 = vld [vmem:[%s1 + $0x438] sm:$0xff]
    %v905 = vld [vmem:[%s1 + $0x440] sm:$0xff]
    %v906 = vld [vmem:[%s1 + $0x448] sm:$0xff]
    %v907 = vld [vmem:[%s1 + $0x450] sm:$0xff]
    %v908 = vld [vmem:[%s1 + $0x458] sm:$0xff]
    %v909 = vld [vmem:[%s1 + $0x460] sm:$0xff]
    %v910 = vld [vmem:[%s1 + $0x468] sm:$0xff]
    %v911 = vld [vmem:[%s1 + $0x470] sm:$0xff]
    %v912 = vld [vmem:[%s1 + $0x478] sm:$0xff]
    %v913 = vld [vmem:[%s1 + $0x480] sm:$0xff]
    %v914 = vld [vmem:[%s1 + $0x488] sm:$0xff]
    %v915 = vld [vmem:[%s1 + $0x490] sm:$0xff]
    %v916 = vld [vmem:[%s1 + $0x498] sm:$0xff]
    %v917 = vld [vmem:[%s1 + $0x4a0] sm:$0xff]
    %v918 = vld [vmem:[%s1 + $0x4a8] sm:$0xff]
    %v919 = vld [vmem:[%s1 + $0x4b0] sm:$0xff]
    %v920 = vld [vmem:[%s1 + $0x4b8] sm:$0xff]
    %v921 = vld [vmem:[%s1 + $0x4c0] sm:$0xff]
    %v922 = vld [vmem:[%s1 + $0x4c8] sm:$0xff]
    %v923 = vld [vmem:[%s1 + $0x4d0] sm:$0xff]
    %v924 = vld [vmem:[%s1 + $0x4d8] sm:$0xff]
    %v925 = vld [vmem:[%s1 + $0x4e0] sm:$0xff]
    %v926 = vld [vmem:[%s1 + $0x4e8] sm:$0xff]
    %v927 = vld [vmem:[%s1 + $0x4f0] sm:$0xff]
    %v928 = vld [vmem:[%s1 + $0x4f8] sm:$0xff]
    %v929 = vld [vmem:[%s1 + $0x500] sm:$0xff]
    %v930 = vld [vmem:[%s1 + $0x508] sm:$0xff]
    %v931 = vld [vmem:[%s1 + $0x510] sm:$0xff]
    %v932 = vld [vmem:[%s1 + $0x518] sm:$0xff]
    %v933 = vld [vmem:[%s1 + $0x520] sm:$0xff]
    %v934 = vld [vmem:[%s1 + $0x528] sm:$0xff]
    %v935 = vld [vmem:[%s1 + $0x530] sm:$0xff]
    %v936 = vld [vmem:[%s1 + $0x538] sm:$0xff]
    %v937 = vld [vmem:[%s1 + $0x540] sm:$0xff]
    %v938 = vld [vmem:[%s1 + $0x548] sm:$0xff]
    %v939 = vld [vmem:[%s1 + $0x550] sm:$0xff]
    %v940 = vld [vmem:[%s1 + $0x558] sm:$0xff]
    %v941 = vld [vmem:[%s1 + $0x560] sm:$0xff]
    %v942 = vld [vmem:[%s1 + $0x568] sm:$0xff]
    %v943 = vld [vmem:[%s1 + $0x570] sm:$0xff]
    %v944 = vld [vmem:[%s1 + $0x578] sm:$0xff]
    %v945 = vld [vmem:[%s1 + $0x580] sm:$0xff]
    %v946 = vld [vmem:[%s1 + $0x588] sm:$0xff]
    %v947 = vld [vmem:[%s1 + $0x590] sm:$0xff]
    %v948 = vld [vmem:[%s1 + $0x598] sm:$0xff]
    %v949 = vld [vmem:[%s1 + $0x5a0] sm:$0xff]
    %v950 = vld [vmem:[%s1 + $0x5a8] sm:$0xff]
    %v951 = vld [vmem:[%s1 + $0x5b0] sm:$0xff]
    %v952 = vld [vmem:[%s1 + $0x5b8] sm:$0xff]
    %v953 = vld [vmem:[%s1 + $0x5c0] sm:$0xff]
    %v954 = vld [vmem:[%s1 + $0x5c8] sm:$0xff]
    %v955 = vld [vmem:[%s1 + $0x5d0] sm:$0xff]
    %v956 = vld [vmem:[%s1 + $0x5d8] sm:$0xff]
    %v957 = vld [vmem:[%s1 + $0x5e0] sm:$0xff]
    %v958 = vld [vmem:[%s1 + $0x5e8] sm:$0xff]
    %v959 = vld [vmem:[%s1 + $0x5f0] sm:$0xff]
    %v960 = vld [vmem:[%s1 + $0x5f8] sm:$0xff]
    %v961 = vld [vmem:[#allocation2] sm:$0x3f]
    %v963 = vperm.slane %v961, 0
    %v964 = vperm.slane %v961, 1
    %v965 = vperm.slane %v961, 2
    %v966 = vperm.slane %v961, 3
    %v967 = vperm.slane %v961, 4
    %v968 = vperm.slane %v961, 5
    %v1039 = vunpack.c.l.b16 %v705
    %v1040 = vunpack.c.h.b16 %v705
    %v1041 = vunpack.c.l.b16 %v706
    %v1042 = vunpack.c.h.b16 %v706
    %v1043 = vunpack.c.l.b16 %v707
    %v1044 = vunpack.c.h.b16 %v707
    %v1045 = vunpack.c.l.b16 %v708
    %v1046 = vunpack.c.h.b16 %v708
    %v1047 = vunpack.c.l.b16 %v709
    %v1048 = vunpack.c.h.b16 %v709
    %v1049 = vunpack.c.l.b16 %v710
    %v1050 = vunpack.c.h.b16 %v710
    %v1051 = vunpack.c.l.b16 %v711
    %v1052 = vunpack.c.h.b16 %v711
    %v1053 = vunpack.c.l.b16 %v712
    %v1054 = vunpack.c.h.b16 %v712
    %v1055 = vunpack.c.l.b16 %v713
    %v1056 = vunpack.c.h.b16 %v713
    %v1057 = vunpack.c.l.b16 %v714
    %v1058 = vunpack.c.h.b16 %v714
    %v1059 = vunpack.c.l.b16 %v715
    %v1060 = vunpack.c.h.b16 %v715
    %v1061 = vunpack.c.l.b16 %v716
    %v1062 = vunpack.c.h.b16 %v716
    %v1063 = vunpack.c.l.b16 %v717
    %v1064 = vunpack.c.h.b16 %v717
    %v1065 = vunpack.c.l.b16 %v718
    %v1066 = vunpack.c.h.b16 %v718
    %v1067 = vunpack.c.l.b16 %v719
    %v1068 = vunpack.c.h.b16 %v719
    %v1069 = vunpack.c.l.b16 %v720
    %v1070 = vunpack.c.h.b16 %v720
    %v1071 = vunpack.c.l.b16 %v721
    %v1072 = vunpack.c.h.b16 %v721
    %v1073 = vunpack.c.l.b16 %v722
    %v1074 = vunpack.c.h.b16 %v722
    %v1075 = vunpack.c.l.b16 %v723
    %v1076 = vunpack.c.h.b16 %v723
    %v1077 = vunpack.c.l.b16 %v724
    %v1078 = vunpack.c.h.b16 %v724
    %v1079 = vunpack.c.l.b16 %v725
    %v1080 = vunpack.c.h.b16 %v725
    %v1081 = vunpack.c.l.b16 %v726
    %v1082 = vunpack.c.h.b16 %v726
    %v1083 = vunpack.c.l.b16 %v727
    %v1084 = vunpack.c.h.b16 %v727
    %v1085 = vunpack.c.l.b16 %v728
    %v1086 = vunpack.c.h.b16 %v728
    %v1087 = vunpack.c.l.b16 %v729
    %v1088 = vunpack.c.h.b16 %v729
    %v1089 = vunpack.c.l.b16 %v730
    %v1090 = vunpack.c.h.b16 %v730
    %v1091 = vunpack.c.l.b16 %v731
    %v1092 = vunpack.c.h.b16 %v731
    %v1093 = vunpack.c.l.b16 %v732
    %v1094 = vunpack.c.h.b16 %v732
    %v1095 = vunpack.c.l.b16 %v733
    %v1096 = vunpack.c.h.b16 %v733
    %v1097 = vunpack.c.l.b16 %v734
    %v1098 = vunpack.c.h.b16 %v734
    %v1099 = vunpack.c.l.b16 %v735
    %v1100 = vunpack.c.h.b16 %v735
    %v1101 = vunpack.c.l.b16 %v736
    %v1102 = vunpack.c.h.b16 %v736
    %v1103 = vunpack.c.l.b16 %v737
    %v1104 = vunpack.c.h.b16 %v737
    %v1105 = vunpack.c.l.b16 %v738
    %v1106 = vunpack.c.h.b16 %v738
    %v1107 = vunpack.c.l.b16 %v739
    %v1108 = vunpack.c.h.b16 %v739
    %v1109 = vunpack.c.l.b16 %v740
    %v1110 = vunpack.c.h.b16 %v740
    %v1111 = vunpack.c.l.b16 %v741
    %v1112 = vunpack.c.h.b16 %v741
    %v1113 = vunpack.c.l.b16 %v742
    %v1114 = vunpack.c.h.b16 %v742
    %v1115 = vunpack.c.l.b16 %v743
    %v1116 = vunpack.c.h.b16 %v743
    %v1117 = vunpack.c.l.b16 %v744
    %v1118 = vunpack.c.h.b16 %v744
    %v1119 = vunpack.c.l.b16 %v745
    %v1120 = vunpack.c.h.b16 %v745
    %v1121 = vunpack.c.l.b16 %v746
    %v1122 = vunpack.c.h.b16 %v746
    %v1123 = vunpack.c.l.b16 %v747
    %v1124 = vunpack.c.h.b16 %v747
    %v1125 = vunpack.c.l.b16 %v748
    %v1126 = vunpack.c.h.b16 %v748
    %v1127 = vunpack.c.l.b16 %v749
    %v1128 = vunpack.c.h.b16 %v749
    %v1129 = vunpack.c.l.b16 %v750
    %v1130 = vunpack.c.h.b16 %v750
    %v1131 = vunpack.c.l.b16 %v751
    %v1132 = vunpack.c.h.b16 %v751
    %v1133 = vunpack.c.l.b16 %v752
    %v1134 = vunpack.c.h.b16 %v752
    %v1135 = vunpack.c.l.b16 %v753
    %v1136 = vunpack.c.h.b16 %v753
    %v1137 = vunpack.c.l.b16 %v754
    %v1138 = vunpack.c.h.b16 %v754
    %v1139 = vunpack.c.l.b16 %v755
    %v1140 = vunpack.c.h.b16 %v755
    %v1141 = vunpack.c.l.b16 %v756
    %v1142 = vunpack.c.h.b16 %v756
    %v1143 = vunpack.c.l.b16 %v757
    %v1144 = vunpack.c.h.b16 %v757
    %v1145 = vunpack.c.l.b16 %v758
    %v1146 = vunpack.c.h.b16 %v758
    %v1147 = vunpack.c.l.b16 %v759
    %v1148 = vunpack.c.h.b16 %v759
    %v1149 = vunpack.c.l.b16 %v760
    %v1150 = vunpack.c.h.b16 %v760
    %v1151 = vunpack.c.l.b16 %v761
    %v1152 = vunpack.c.h.b16 %v761
    %v1153 = vunpack.c.l.b16 %v762
    %v1154 = vunpack.c.h.b16 %v762
    %v1155 = vunpack.c.l.b16 %v763
    %v1156 = vunpack.c.h.b16 %v763
    %v1157 = vunpack.c.l.b16 %v764
    %v1158 = vunpack.c.h.b16 %v764
    %v1159 = vunpack.c.l.b16 %v765
    %v1160 = vunpack.c.h.b16 %v765
    %v1161 = vunpack.c.l.b16 %v766
    %v1162 = vunpack.c.h.b16 %v766
    %v1163 = vunpack.c.l.b16 %v767
    %v1164 = vunpack.c.h.b16 %v767
    %v1165 = vunpack.c.l.b16 %v768
    %v1166 = vunpack.c.h.b16 %v768
    %v1167 = vlaneseq
    %v1168 = vand.u32 %v1167, 127
    %v1169 = vperm.slane %v1039, %v1168
    %v1170 = vadd.s32 %v1168, 4294967288
    %v1171 = vperm.slane %v1040, %v1170
    %vm1172 = vcmask 130112
    %v1173 = vsel %vm1172, %v1171, %v1169
    %v1174 = vadd.s32 %v1168, 4294967280
    %v1175 = vperm.slane %v1041, %v1174
    %vm1176 = vcmask 195712
    %v1177 = vsel %vm1176, %v1175, %v1173
    %v1178 = vadd.s32 %v1168, 4294967272
    %v1179 = vperm.slane %v1042, %v1178
    %vm1180 = vcmask 261312
    %v1181 = vsel %vm1180, %v1179, %v1177
    %v1182 = vadd.s32 %v1168, 4294967264
    %v1183 = vperm.slane %v1043, %v1182
    %vm1184 = vcmask 326912
    %v1185 = vsel %vm1184, %v1183, %v1181
    %v1186 = vadd.s32 %v1168, 4294967256
    %v1187 = vperm.slane %v1044, %v1186
    %vm1188 = vcmask 392512
    %v1189 = vsel %vm1188, %v1187, %v1185
    %v1190 = vadd.s32 %v1168, 4294967248
    %v1191 = vperm.slane %v1045, %v1190
    %vm1192 = vcmask 458112
    %v1193 = vsel %vm1192, %v1191, %v1189
    %v1194 = vadd.s32 %v1168, 4294967240
    %v1195 = vperm.slane %v1046, %v1194
    %vm1196 = vcmask 523712
    %v1197 = vsel %vm1196, %v1195, %v1193
    %v1198 = vadd.s32 %v1168, 4294967232
    %v1199 = vperm.slane %v1047, %v1198
    %vm1200 = vcmask 589312
    %v1201 = vsel %vm1200, %v1199, %v1197
    %v1202 = vadd.s32 %v1168, 4294967224
    %v1203 = vperm.slane %v1048, %v1202
    %vm1204 = vcmask 654912
    %v1205 = vsel %vm1204, %v1203, %v1201
    %v1206 = vadd.s32 %v1168, 4294967216
    %v1207 = vperm.slane %v1049, %v1206
    %vm1208 = vcmask 720512
    %v1209 = vsel %vm1208, %v1207, %v1205
    %v1210 = vadd.s32 %v1168, 4294967208
    %v1211 = vperm.slane %v1050, %v1210
    %vm1212 = vcmask 786112
    %v1213 = vsel %vm1212, %v1211, %v1209
    %v1214 = vadd.s32 %v1168, 4294967200
    %v1215 = vperm.slane %v1051, %v1214
    %vm1216 = vcmask 851712
    %v1217 = vsel %vm1216, %v1215, %v1213
    %v1218 = vadd.s32 %v1168, 4294967192
    %v1219 = vperm.slane %v1052, %v1218
    %vm1220 = vcmask 917312
    %v1221 = vsel %vm1220, %v1219, %v1217
    %v1222 = vadd.s32 %v1168, 4294967184
    %v1223 = vperm.slane %v1053, %v1222
    %vm1224 = vcmask 982912
    %v1225 = vsel %vm1224, %v1223, %v1221
    %v1226 = vadd.s32 %v1168, 4294967176
    %v1227 = vperm.slane %v1054, %v1226
    %vm1228 = vcmask 1048512
    %v1229 = vsel %vm1228, %v1227, %v1225
    %v1230 = vperm.slane %v1055, %v1168
    %v1231 = vperm.slane %v1056, %v1170
    %v1232 = vsel %vm1172, %v1231, %v1230
    %v1233 = vperm.slane %v1057, %v1174
    %v1234 = vsel %vm1176, %v1233, %v1232
    %v1235 = vperm.slane %v1058, %v1178
    %v1236 = vsel %vm1180, %v1235, %v1234
    %v1237 = vperm.slane %v1059, %v1182
    %v1238 = vsel %vm1184, %v1237, %v1236
    %v1239 = vperm.slane %v1060, %v1186
    %v1240 = vsel %vm1188, %v1239, %v1238
    %v1241 = vperm.slane %v1061, %v1190
    %v1242 = vsel %vm1192, %v1241, %v1240
    %v1243 = vperm.slane %v1062, %v1194
    %v1244 = vsel %vm1196, %v1243, %v1242
    %v1245 = vperm.slane %v1063, %v1198
    %v1246 = vsel %vm1200, %v1245, %v1244
    %v1247 = vperm.slane %v1064, %v1202
    %v1248 = vsel %vm1204, %v1247, %v1246
    %v1249 = vperm.slane %v1065, %v1206
    %v1250 = vsel %vm1208, %v1249, %v1248
    %v1251 = vperm.slane %v1066, %v1210
    %v1252 = vsel %vm1212, %v1251, %v1250
    %v1253 = vperm.slane %v1067, %v1214
    %v1254 = vsel %vm1216, %v1253, %v1252
    %v1255 = vperm.slane %v1068, %v1218
    %v1256 = vsel %vm1220, %v1255, %v1254
    %v1257 = vperm.slane %v1069, %v1222
    %v1258 = vsel %vm1224, %v1257, %v1256
    %v1259 = vperm.slane %v1070, %v1226
    %v1260 = vsel %vm1228, %v1259, %v1258
    %v1261 = vperm.slane %v1071, %v1168
    %v1262 = vperm.slane %v1072, %v1170
    %v1263 = vsel %vm1172, %v1262, %v1261
    %v1264 = vperm.slane %v1073, %v1174
    %v1265 = vsel %vm1176, %v1264, %v1263
    %v1266 = vperm.slane %v1074, %v1178
    %v1267 = vsel %vm1180, %v1266, %v1265
    %v1268 = vperm.slane %v1075, %v1182
    %v1269 = vsel %vm1184, %v1268, %v1267
    %v1270 = vperm.slane %v1076, %v1186
    %v1271 = vsel %vm1188, %v1270, %v1269
    %v1272 = vperm.slane %v1077, %v1190
    %v1273 = vsel %vm1192, %v1272, %v1271
    %v1274 = vperm.slane %v1078, %v1194
    %v1275 = vsel %vm1196, %v1274, %v1273
    %v1276 = vperm.slane %v1079, %v1198
    %v1277 = vsel %vm1200, %v1276, %v1275
    %v1278 = vperm.slane %v1080, %v1202
    %v1279 = vsel %vm1204, %v1278, %v1277
    %v1280 = vperm.slane %v1081, %v1206
    %v1281 = vsel %vm1208, %v1280, %v1279
    %v1282 = vperm.slane %v1082, %v1210
    %v1283 = vsel %vm1212, %v1282, %v1281
    %v1284 = vperm.slane %v1083, %v1214
    %v1285 = vsel %vm1216, %v1284, %v1283
    %v1286 = vperm.slane %v1084, %v1218
    %v1287 = vsel %vm1220, %v1286, %v1285
    %v1288 = vperm.slane %v1085, %v1222
    %v1289 = vsel %vm1224, %v1288, %v1287
    %v1290 = vperm.slane %v1086, %v1226
    %v1291 = vsel %vm1228, %v1290, %v1289
    %v1292 = vperm.slane %v1087, %v1168
    %v1293 = vperm.slane %v1088, %v1170
    %v1294 = vsel %vm1172, %v1293, %v1292
    %v1295 = vperm.slane %v1089, %v1174
    %v1296 = vsel %vm1176, %v1295, %v1294
    %v1297 = vperm.slane %v1090, %v1178
    %v1298 = vsel %vm1180, %v1297, %v1296
    %v1299 = vperm.slane %v1091, %v1182
    %v1300 = vsel %vm1184, %v1299, %v1298
    %v1301 = vperm.slane %v1092, %v1186
    %v1302 = vsel %vm1188, %v1301, %v1300
    %v1303 = vperm.slane %v1093, %v1190
    %v1304 = vsel %vm1192, %v1303, %v1302
    %v1305 = vperm.slane %v1094, %v1194
    %v1306 = vsel %vm1196, %v1305, %v1304
    %v1307 = vperm.slane %v1095, %v1198
    %v1308 = vsel %vm1200, %v1307, %v1306
    %v1309 = vperm.slane %v1096, %v1202
    %v1310 = vsel %vm1204, %v1309, %v1308
    %v1311 = vperm.slane %v1097, %v1206
    %v1312 = vsel %vm1208, %v1311, %v1310
    %v1313 = vperm.slane %v1098, %v1210
    %v1314 = vsel %vm1212, %v1313, %v1312
    %v1315 = vperm.slane %v1099, %v1214
    %v1316 = vsel %vm1216, %v1315, %v1314
    %v1317 = vperm.slane %v1100, %v1218
    %v1318 = vsel %vm1220, %v1317, %v1316
    %v1319 = vperm.slane %v1101, %v1222
    %v1320 = vsel %vm1224, %v1319, %v1318
    %v1321 = vperm.slane %v1102, %v1226
    %v1322 = vsel %vm1228, %v1321, %v1320
    %v1323 = vperm.slane %v1103, %v1168
    %v1324 = vperm.slane %v1104, %v1170
    %v1325 = vsel %vm1172, %v1324, %v1323
    %v1326 = vperm.slane %v1105, %v1174
    %v1327 = vsel %vm1176, %v1326, %v1325
    %v1328 = vperm.slane %v1106, %v1178
    %v1329 = vsel %vm1180, %v1328, %v1327
    %v1330 = vperm.slane %v1107, %v1182
    %v1331 = vsel %vm1184, %v1330, %v1329
    %v1332 = vperm.slane %v1108, %v1186
    %v1333 = vsel %vm1188, %v1332, %v1331
    %v1334 = vperm.slane %v1109, %v1190
    %v1335 = vsel %vm1192, %v1334, %v1333
    %v1336 = vperm.slane %v1110, %v1194
    %v1337 = vsel %vm1196, %v1336, %v1335
    %v1338 = vperm.slane %v1111, %v1198
    %v1339 = vsel %vm1200, %v1338, %v1337
    %v1340 = vperm.slane %v1112, %v1202
    %v1341 = vsel %vm1204, %v1340, %v1339
    %v1342 = vperm.slane %v1113, %v1206
    %v1343 = vsel %vm1208, %v1342, %v1341
    %v1344 = vperm.slane %v1114, %v1210
    %v1345 = vsel %vm1212, %v1344, %v1343
    %v1346 = vperm.slane %v1115, %v1214
    %v1347 = vsel %vm1216, %v1346, %v1345
    %v1348 = vperm.slane %v1116, %v1218
    %v1349 = vsel %vm1220, %v1348, %v1347
    %v1350 = vperm.slane %v1117, %v1222
    %v1351 = vsel %vm1224, %v1350, %v1349
    %v1352 = vperm.slane %v1118, %v1226
    %v1353 = vsel %vm1228, %v1352, %v1351
    %v1354 = vperm.slane %v1119, %v1168
    %v1355 = vperm.slane %v1120, %v1170
    %v1356 = vsel %vm1172, %v1355, %v1354
    %v1357 = vperm.slane %v1121, %v1174
    %v1358 = vsel %vm1176, %v1357, %v1356
    %v1359 = vperm.slane %v1122, %v1178
    %v1360 = vsel %vm1180, %v1359, %v1358
    %v1361 = vperm.slane %v1123, %v1182
    %v1362 = vsel %vm1184, %v1361, %v1360
    %v1363 = vperm.slane %v1124, %v1186
    %v1364 = vsel %vm1188, %v1363, %v1362
    %v1365 = vperm.slane %v1125, %v1190
    %v1366 = vsel %vm1192, %v1365, %v1364
    %v1367 = vperm.slane %v1126, %v1194
    %v1368 = vsel %vm1196, %v1367, %v1366
    %v1369 = vperm.slane %v1127, %v1198
    %v1370 = vsel %vm1200, %v1369, %v1368
    %v1371 = vperm.slane %v1128, %v1202
    %v1372 = vsel %vm1204, %v1371, %v1370
    %v1373 = vperm.slane %v1129, %v1206
    %v1374 = vsel %vm1208, %v1373, %v1372
    %v1375 = vperm.slane %v1130, %v1210
    %v1376 = vsel %vm1212, %v1375, %v1374
    %v1377 = vperm.slane %v1131, %v1214
    %v1378 = vsel %vm1216, %v1377, %v1376
    %v1379 = vperm.slane %v1132, %v1218
    %v1380 = vsel %vm1220, %v1379, %v1378
    %v1381 = vperm.slane %v1133, %v1222
    %v1382 = vsel %vm1224, %v1381, %v1380
    %v1383 = vperm.slane %v1134, %v1226
    %v1384 = vsel %vm1228, %v1383, %v1382
    %v1385 = vperm.slane %v1135, %v1168
    %v1386 = vperm.slane %v1136, %v1170
    %v1387 = vsel %vm1172, %v1386, %v1385
    %v1388 = vperm.slane %v1137, %v1174
    %v1389 = vsel %vm1176, %v1388, %v1387
    %v1390 = vperm.slane %v1138, %v1178
    %v1391 = vsel %vm1180, %v1390, %v1389
    %v1392 = vperm.slane %v1139, %v1182
    %v1393 = vsel %vm1184, %v1392, %v1391
    %v1394 = vperm.slane %v1140, %v1186
    %v1395 = vsel %vm1188, %v1394, %v1393
    %v1396 = vperm.slane %v1141, %v1190
    %v1397 = vsel %vm1192, %v1396, %v1395
    %v1398 = vperm.slane %v1142, %v1194
    %v1399 = vsel %vm1196, %v1398, %v1397
    %v1400 = vperm.slane %v1143, %v1198
    %v1401 = vsel %vm1200, %v1400, %v1399
    %v1402 = vperm.slane %v1144, %v1202
    %v1403 = vsel %vm1204, %v1402, %v1401
    %v1404 = vperm.slane %v1145, %v1206
    %v1405 = vsel %vm1208, %v1404, %v1403
    %v1406 = vperm.slane %v1146, %v1210
    %v1407 = vsel %vm1212, %v1406, %v1405
    %v1408 = vperm.slane %v1147, %v1214
    %v1409 = vsel %vm1216, %v1408, %v1407
    %v1410 = vperm.slane %v1148, %v1218
    %v1411 = vsel %vm1220, %v1410, %v1409
    %v1412 = vperm.slane %v1149, %v1222
    %v1413 = vsel %vm1224, %v1412, %v1411
    %v1414 = vperm.slane %v1150, %v1226
    %v1415 = vsel %vm1228, %v1414, %v1413
    %v1416 = vperm.slane %v1151, %v1168
    %v1417 = vperm.slane %v1152, %v1170
    %v1418 = vsel %vm1172, %v1417, %v1416
    %v1419 = vperm.slane %v1153, %v1174
    %v1420 = vsel %vm1176, %v1419, %v1418
    %v1421 = vperm.slane %v1154, %v1178
    %v1422 = vsel %vm1180, %v1421, %v1420
    %v1423 = vperm.slane %v1155, %v1182
    %v1424 = vsel %vm1184, %v1423, %v1422
    %v1425 = vperm.slane %v1156, %v1186
    %v1426 = vsel %vm1188, %v1425, %v1424
    %v1427 = vperm.slane %v1157, %v1190
    %v1428 = vsel %vm1192, %v1427, %v1426
    %v1429 = vperm.slane %v1158, %v1194
    %v1430 = vsel %vm1196, %v1429, %v1428
    %v1431 = vperm.slane %v1159, %v1198
    %v1432 = vsel %vm1200, %v1431, %v1430
    %v1433 = vperm.slane %v1160, %v1202
    %v1434 = vsel %vm1204, %v1433, %v1432
    %v1435 = vperm.slane %v1161, %v1206
    %v1436 = vsel %vm1208, %v1435, %v1434
    %v1437 = vperm.slane %v1162, %v1210
    %v1438 = vsel %vm1212, %v1437, %v1436
    %v1439 = vperm.slane %v1163, %v1214
    %v1440 = vsel %vm1216, %v1439, %v1438
    %v1441 = vperm.slane %v1164, %v1218
    %v1442 = vsel %vm1220, %v1441, %v1440
    %v1443 = vperm.slane %v1165, %v1222
    %v1444 = vsel %vm1224, %v1443, %v1442
    %v1445 = vperm.slane %v1166, %v1226
    %v1446 = vsel %vm1228, %v1445, %v1444
    %vm1447 = vcmask 1041409
    %v1448 = vsel %vm1447, %v1353, %v1229
    %v1449 = vsel %vm1447, %v1384, %v1260
    %v1450 = vsel %vm1447, %v1415, %v1291
    %v1451 = vsel %vm1447, %v1446, %v1322
    %v1452 = vpack.c.b16 %v1448, %v1448
    %v1453 = vpack.c.b16 %v1449, %v1449
    %v1454 = vpack.c.b16 %v1450, %v1450
    %v1455 = vpack.c.b16 %v1451, %v1451
    %v1652 = vunpack.c.l.b16 %v769
    %v1653 = vunpack.c.h.b16 %v769
    %v1654 = vunpack.c.l.b16 %v770
    %v1655 = vunpack.c.h.b16 %v770
    %v1656 = vunpack.c.l.b16 %v771
    %v1657 = vunpack.c.h.b16 %v771
    %v1658 = vunpack.c.l.b16 %v772
    %v1659 = vunpack.c.h.b16 %v772
    %v1660 = vunpack.c.l.b16 %v773
    %v1661 = vunpack.c.h.b16 %v773
    %v1662 = vunpack.c.l.b16 %v774
    %v1663 = vunpack.c.h.b16 %v774
    %v1664 = vunpack.c.l.b16 %v775
    %v1665 = vunpack.c.h.b16 %v775
    %v1666 = vunpack.c.l.b16 %v776
    %v1667 = vunpack.c.h.b16 %v776
    %v1668 = vunpack.c.l.b16 %v777
    %v1669 = vunpack.c.h.b16 %v777
    %v1670 = vunpack.c.l.b16 %v778
    %v1671 = vunpack.c.h.b16 %v778
    %v1672 = vunpack.c.l.b16 %v779
    %v1673 = vunpack.c.h.b16 %v779
    %v1674 = vunpack.c.l.b16 %v780
    %v1675 = vunpack.c.h.b16 %v780
    %v1676 = vunpack.c.l.b16 %v781
    %v1677 = vunpack.c.h.b16 %v781
    %v1678 = vunpack.c.l.b16 %v782
    %v1679 = vunpack.c.h.b16 %v782
    %v1680 = vunpack.c.l.b16 %v783
    %v1681 = vunpack.c.h.b16 %v783
    %v1682 = vunpack.c.l.b16 %v784
    %v1683 = vunpack.c.h.b16 %v784
    %v1684 = vunpack.c.l.b16 %v785
    %v1685 = vunpack.c.h.b16 %v785
    %v1686 = vunpack.c.l.b16 %v786
    %v1687 = vunpack.c.h.b16 %v786
    %v1688 = vunpack.c.l.b16 %v787
    %v1689 = vunpack.c.h.b16 %v787
    %v1690 = vunpack.c.l.b16 %v788
    %v1691 = vunpack.c.h.b16 %v788
    %v1692 = vunpack.c.l.b16 %v789
    %v1693 = vunpack.c.h.b16 %v789
    %v1694 = vunpack.c.l.b16 %v790
    %v1695 = vunpack.c.h.b16 %v790
    %v1696 = vunpack.c.l.b16 %v791
    %v1697 = vunpack.c.h.b16 %v791
    %v1698 = vunpack.c.l.b16 %v792
    %v1699 = vunpack.c.h.b16 %v792
    %v1700 = vunpack.c.l.b16 %v793
    %v1701 = vunpack.c.h.b16 %v793
    %v1702 = vunpack.c.l.b16 %v794
    %v1703 = vunpack.c.h.b16 %v794
    %v1704 = vunpack.c.l.b16 %v795
    %v1705 = vunpack.c.h.b16 %v795
    %v1706 = vunpack.c.l.b16 %v796
    %v1707 = vunpack.c.h.b16 %v796
    %v1708 = vunpack.c.l.b16 %v797
    %v1709 = vunpack.c.h.b16 %v797
    %v1710 = vunpack.c.l.b16 %v798
    %v1711 = vunpack.c.h.b16 %v798
    %v1712 = vunpack.c.l.b16 %v799
    %v1713 = vunpack.c.h.b16 %v799
    %v1714 = vunpack.c.l.b16 %v800
    %v1715 = vunpack.c.h.b16 %v800
    %v1716 = vunpack.c.l.b16 %v801
    %v1717 = vunpack.c.h.b16 %v801
    %v1718 = vunpack.c.l.b16 %v802
    %v1719 = vunpack.c.h.b16 %v802
    %v1720 = vunpack.c.l.b16 %v803
    %v1721 = vunpack.c.h.b16 %v803
    %v1722 = vunpack.c.l.b16 %v804
    %v1723 = vunpack.c.h.b16 %v804
    %v1724 = vunpack.c.l.b16 %v805
    %v1725 = vunpack.c.h.b16 %v805
    %v1726 = vunpack.c.l.b16 %v806
    %v1727 = vunpack.c.h.b16 %v806
    %v1728 = vunpack.c.l.b16 %v807
    %v1729 = vunpack.c.h.b16 %v807
    %v1730 = vunpack.c.l.b16 %v808
    %v1731 = vunpack.c.h.b16 %v808
    %v1732 = vunpack.c.l.b16 %v809
    %v1733 = vunpack.c.h.b16 %v809
    %v1734 = vunpack.c.l.b16 %v810
    %v1735 = vunpack.c.h.b16 %v810
    %v1736 = vunpack.c.l.b16 %v811
    %v1737 = vunpack.c.h.b16 %v811
    %v1738 = vunpack.c.l.b16 %v812
    %v1739 = vunpack.c.h.b16 %v812
    %v1740 = vunpack.c.l.b16 %v813
    %v1741 = vunpack.c.h.b16 %v813
    %v1742 = vunpack.c.l.b16 %v814
    %v1743 = vunpack.c.h.b16 %v814
    %v1744 = vunpack.c.l.b16 %v815
    %v1745 = vunpack.c.h.b16 %v815
    %v1746 = vunpack.c.l.b16 %v816
    %v1747 = vunpack.c.h.b16 %v816
    %v1748 = vunpack.c.l.b16 %v817
    %v1749 = vunpack.c.h.b16 %v817
    %v1750 = vunpack.c.l.b16 %v818
    %v1751 = vunpack.c.h.b16 %v818
    %v1752 = vunpack.c.l.b16 %v819
    %v1753 = vunpack.c.h.b16 %v819
    %v1754 = vunpack.c.l.b16 %v820
    %v1755 = vunpack.c.h.b16 %v820
    %v1756 = vunpack.c.l.b16 %v821
    %v1757 = vunpack.c.h.b16 %v821
    %v1758 = vunpack.c.l.b16 %v822
    %v1759 = vunpack.c.h.b16 %v822
    %v1760 = vunpack.c.l.b16 %v823
    %v1761 = vunpack.c.h.b16 %v823
    %v1762 = vunpack.c.l.b16 %v824
    %v1763 = vunpack.c.h.b16 %v824
    %v1764 = vunpack.c.l.b16 %v825
    %v1765 = vunpack.c.h.b16 %v825
    %v1766 = vunpack.c.l.b16 %v826
    %v1767 = vunpack.c.h.b16 %v826
    %v1768 = vunpack.c.l.b16 %v827
    %v1769 = vunpack.c.h.b16 %v827
    %v1770 = vunpack.c.l.b16 %v828
    %v1771 = vunpack.c.h.b16 %v828
    %v1772 = vunpack.c.l.b16 %v829
    %v1773 = vunpack.c.h.b16 %v829
    %v1774 = vunpack.c.l.b16 %v830
    %v1775 = vunpack.c.h.b16 %v830
    %v1776 = vunpack.c.l.b16 %v831
    %v1777 = vunpack.c.h.b16 %v831
    %v1778 = vunpack.c.l.b16 %v832
    %v1779 = vunpack.c.h.b16 %v832
    %v1780 = vunpack.c.l.b16 %v833
    %v1781 = vunpack.c.h.b16 %v833
    %v1782 = vunpack.c.l.b16 %v834
    %v1783 = vunpack.c.h.b16 %v834
    %v1784 = vunpack.c.l.b16 %v835
    %v1785 = vunpack.c.h.b16 %v835
    %v1786 = vunpack.c.l.b16 %v836
    %v1787 = vunpack.c.h.b16 %v836
    %v1788 = vunpack.c.l.b16 %v837
    %v1789 = vunpack.c.h.b16 %v837
    %v1790 = vunpack.c.l.b16 %v838
    %v1791 = vunpack.c.h.b16 %v838
    %v1792 = vunpack.c.l.b16 %v839
    %v1793 = vunpack.c.h.b16 %v839
    %v1794 = vunpack.c.l.b16 %v840
    %v1795 = vunpack.c.h.b16 %v840
    %v1796 = vunpack.c.l.b16 %v841
    %v1797 = vunpack.c.h.b16 %v841
    %v1798 = vunpack.c.l.b16 %v842
    %v1799 = vunpack.c.h.b16 %v842
    %v1800 = vunpack.c.l.b16 %v843
    %v1801 = vunpack.c.h.b16 %v843
    %v1802 = vunpack.c.l.b16 %v844
    %v1803 = vunpack.c.h.b16 %v844
    %v1804 = vunpack.c.l.b16 %v845
    %v1805 = vunpack.c.h.b16 %v845
    %v1806 = vunpack.c.l.b16 %v846
    %v1807 = vunpack.c.h.b16 %v846
    %v1808 = vunpack.c.l.b16 %v847
    %v1809 = vunpack.c.h.b16 %v847
    %v1810 = vunpack.c.l.b16 %v848
    %v1811 = vunpack.c.h.b16 %v848
    %v1812 = vunpack.c.l.b16 %v849
    %v1813 = vunpack.c.h.b16 %v849
    %v1814 = vunpack.c.l.b16 %v850
    %v1815 = vunpack.c.h.b16 %v850
    %v1816 = vunpack.c.l.b16 %v851
    %v1817 = vunpack.c.h.b16 %v851
    %v1818 = vunpack.c.l.b16 %v852
    %v1819 = vunpack.c.h.b16 %v852
    %v1820 = vunpack.c.l.b16 %v853
    %v1821 = vunpack.c.h.b16 %v853
    %v1822 = vunpack.c.l.b16 %v854
    %v1823 = vunpack.c.h.b16 %v854
    %v1824 = vunpack.c.l.b16 %v855
    %v1825 = vunpack.c.h.b16 %v855
    %v1826 = vunpack.c.l.b16 %v856
    %v1827 = vunpack.c.h.b16 %v856
    %v1828 = vunpack.c.l.b16 %v857
    %v1829 = vunpack.c.h.b16 %v857
    %v1830 = vunpack.c.l.b16 %v858
    %v1831 = vunpack.c.h.b16 %v858
    %v1832 = vunpack.c.l.b16 %v859
    %v1833 = vunpack.c.h.b16 %v859
    %v1834 = vunpack.c.l.b16 %v860
    %v1835 = vunpack.c.h.b16 %v860
    %v1836 = vunpack.c.l.b16 %v861
    %v1837 = vunpack.c.h.b16 %v861
    %v1838 = vunpack.c.l.b16 %v862
    %v1839 = vunpack.c.h.b16 %v862
    %v1840 = vunpack.c.l.b16 %v863
    %v1841 = vunpack.c.h.b16 %v863
    %v1842 = vunpack.c.l.b16 %v864
    %v1843 = vunpack.c.h.b16 %v864
    %v1844 = vunpack.c.l.b16 %v865
    %v1845 = vunpack.c.h.b16 %v865
    %v1846 = vunpack.c.l.b16 %v866
    %v1847 = vunpack.c.h.b16 %v866
    %v1848 = vunpack.c.l.b16 %v867
    %v1849 = vunpack.c.h.b16 %v867
    %v1850 = vunpack.c.l.b16 %v868
    %v1851 = vunpack.c.h.b16 %v868
    %v1852 = vunpack.c.l.b16 %v869
    %v1853 = vunpack.c.h.b16 %v869
    %v1854 = vunpack.c.l.b16 %v870
    %v1855 = vunpack.c.h.b16 %v870
    %v1856 = vunpack.c.l.b16 %v871
    %v1857 = vunpack.c.h.b16 %v871
    %v1858 = vunpack.c.l.b16 %v872
    %v1859 = vunpack.c.h.b16 %v872
    %v1860 = vunpack.c.l.b16 %v873
    %v1861 = vunpack.c.h.b16 %v873
    %v1862 = vunpack.c.l.b16 %v874
    %v1863 = vunpack.c.h.b16 %v874
    %v1864 = vunpack.c.l.b16 %v875
    %v1865 = vunpack.c.h.b16 %v875
    %v1866 = vunpack.c.l.b16 %v876
    %v1867 = vunpack.c.h.b16 %v876
    %v1868 = vunpack.c.l.b16 %v877
    %v1869 = vunpack.c.h.b16 %v877
    %v1870 = vunpack.c.l.b16 %v878
    %v1871 = vunpack.c.h.b16 %v878
    %v1872 = vunpack.c.l.b16 %v879
    %v1873 = vunpack.c.h.b16 %v879
    %v1874 = vunpack.c.l.b16 %v880
    %v1875 = vunpack.c.h.b16 %v880
    %v1876 = vunpack.c.l.b16 %v881
    %v1877 = vunpack.c.h.b16 %v881
    %v1878 = vunpack.c.l.b16 %v882
    %v1879 = vunpack.c.h.b16 %v882
    %v1880 = vunpack.c.l.b16 %v883
    %v1881 = vunpack.c.h.b16 %v883
    %v1882 = vunpack.c.l.b16 %v884
    %v1883 = vunpack.c.h.b16 %v884
    %v1884 = vunpack.c.l.b16 %v885
    %v1885 = vunpack.c.h.b16 %v885
    %v1886 = vunpack.c.l.b16 %v886
    %v1887 = vunpack.c.h.b16 %v886
    %v1888 = vunpack.c.l.b16 %v887
    %v1889 = vunpack.c.h.b16 %v887
    %v1890 = vunpack.c.l.b16 %v888
    %v1891 = vunpack.c.h.b16 %v888
    %v1892 = vunpack.c.l.b16 %v889
    %v1893 = vunpack.c.h.b16 %v889
    %v1894 = vunpack.c.l.b16 %v890
    %v1895 = vunpack.c.h.b16 %v890
    %v1896 = vunpack.c.l.b16 %v891
    %v1897 = vunpack.c.h.b16 %v891
    %v1898 = vunpack.c.l.b16 %v892
    %v1899 = vunpack.c.h.b16 %v892
    %v1900 = vunpack.c.l.b16 %v893
    %v1901 = vunpack.c.h.b16 %v893
    %v1902 = vunpack.c.l.b16 %v894
    %v1903 = vunpack.c.h.b16 %v894
    %v1904 = vunpack.c.l.b16 %v895
    %v1905 = vunpack.c.h.b16 %v895
    %v1906 = vunpack.c.l.b16 %v896
    %v1907 = vunpack.c.h.b16 %v896
    %v1908 = vunpack.c.l.b16 %v897
    %v1909 = vunpack.c.h.b16 %v897
    %v1910 = vunpack.c.l.b16 %v898
    %v1911 = vunpack.c.h.b16 %v898
    %v1912 = vunpack.c.l.b16 %v899
    %v1913 = vunpack.c.h.b16 %v899
    %v1914 = vunpack.c.l.b16 %v900
    %v1915 = vunpack.c.h.b16 %v900
    %v1916 = vunpack.c.l.b16 %v901
    %v1917 = vunpack.c.h.b16 %v901
    %v1918 = vunpack.c.l.b16 %v902
    %v1919 = vunpack.c.h.b16 %v902
    %v1920 = vunpack.c.l.b16 %v903
    %v1921 = vunpack.c.h.b16 %v903
    %v1922 = vunpack.c.l.b16 %v904
    %v1923 = vunpack.c.h.b16 %v904
    %v1924 = vunpack.c.l.b16 %v905
    %v1925 = vunpack.c.h.b16 %v905
    %v1926 = vunpack.c.l.b16 %v906
    %v1927 = vunpack.c.h.b16 %v906
    %v1928 = vunpack.c.l.b16 %v907
    %v1929 = vunpack.c.h.b16 %v907
    %v1930 = vunpack.c.l.b16 %v908
    %v1931 = vunpack.c.h.b16 %v908
    %v1932 = vunpack.c.l.b16 %v909
    %v1933 = vunpack.c.h.b16 %v909
    %v1934 = vunpack.c.l.b16 %v910
    %v1935 = vunpack.c.h.b16 %v910
    %v1936 = vunpack.c.l.b16 %v911
    %v1937 = vunpack.c.h.b16 %v911
    %v1938 = vunpack.c.l.b16 %v912
    %v1939 = vunpack.c.h.b16 %v912
    %v1940 = vunpack.c.l.b16 %v913
    %v1941 = vunpack.c.h.b16 %v913
    %v1942 = vunpack.c.l.b16 %v914
    %v1943 = vunpack.c.h.b16 %v914
    %v1944 = vunpack.c.l.b16 %v915
    %v1945 = vunpack.c.h.b16 %v915
    %v1946 = vunpack.c.l.b16 %v916
    %v1947 = vunpack.c.h.b16 %v916
    %v1948 = vunpack.c.l.b16 %v917
    %v1949 = vunpack.c.h.b16 %v917
    %v1950 = vunpack.c.l.b16 %v918
    %v1951 = vunpack.c.h.b16 %v918
    %v1952 = vunpack.c.l.b16 %v919
    %v1953 = vunpack.c.h.b16 %v919
    %v1954 = vunpack.c.l.b16 %v920
    %v1955 = vunpack.c.h.b16 %v920
    %v1956 = vunpack.c.l.b16 %v921
    %v1957 = vunpack.c.h.b16 %v921
    %v1958 = vunpack.c.l.b16 %v922
    %v1959 = vunpack.c.h.b16 %v922
    %v1960 = vunpack.c.l.b16 %v923
    %v1961 = vunpack.c.h.b16 %v923
    %v1962 = vunpack.c.l.b16 %v924
    %v1963 = vunpack.c.h.b16 %v924
    %v1964 = vunpack.c.l.b16 %v925
    %v1965 = vunpack.c.h.b16 %v925
    %v1966 = vunpack.c.l.b16 %v926
    %v1967 = vunpack.c.h.b16 %v926
    %v1968 = vunpack.c.l.b16 %v927
    %v1969 = vunpack.c.h.b16 %v927
    %v1970 = vunpack.c.l.b16 %v928
    %v1971 = vunpack.c.h.b16 %v928
    %v1972 = vunpack.c.l.b16 %v929
    %v1973 = vunpack.c.h.b16 %v929
    %v1974 = vunpack.c.l.b16 %v930
    %v1975 = vunpack.c.h.b16 %v930
    %v1976 = vunpack.c.l.b16 %v931
    %v1977 = vunpack.c.h.b16 %v931
    %v1978 = vunpack.c.l.b16 %v932
    %v1979 = vunpack.c.h.b16 %v932
    %v1980 = vunpack.c.l.b16 %v933
    %v1981 = vunpack.c.h.b16 %v933
    %v1982 = vunpack.c.l.b16 %v934
    %v1983 = vunpack.c.h.b16 %v934
    %v1984 = vunpack.c.l.b16 %v935
    %v1985 = vunpack.c.h.b16 %v935
    %v1986 = vunpack.c.l.b16 %v936
    %v1987 = vunpack.c.h.b16 %v936
    %v1988 = vunpack.c.l.b16 %v937
    %v1989 = vunpack.c.h.b16 %v937
    %v1990 = vunpack.c.l.b16 %v938
    %v1991 = vunpack.c.h.b16 %v938
    %v1992 = vunpack.c.l.b16 %v939
    %v1993 = vunpack.c.h.b16 %v939
    %v1994 = vunpack.c.l.b16 %v940
    %v1995 = vunpack.c.h.b16 %v940
    %v1996 = vunpack.c.l.b16 %v941
    %v1997 = vunpack.c.h.b16 %v941
    %v1998 = vunpack.c.l.b16 %v942
    %v1999 = vunpack.c.h.b16 %v942
    %v2000 = vunpack.c.l.b16 %v943
    %v2001 = vunpack.c.h.b16 %v943
    %v2002 = vunpack.c.l.b16 %v944
    %v2003 = vunpack.c.h.b16 %v944
    %v2004 = vunpack.c.l.b16 %v945
    %v2005 = vunpack.c.h.b16 %v945
    %v2006 = vunpack.c.l.b16 %v946
    %v2007 = vunpack.c.h.b16 %v946
    %v2008 = vunpack.c.l.b16 %v947
    %v2009 = vunpack.c.h.b16 %v947
    %v2010 = vunpack.c.l.b16 %v948
    %v2011 = vunpack.c.h.b16 %v948
    %v2012 = vunpack.c.l.b16 %v949
    %v2013 = vunpack.c.h.b16 %v949
    %v2014 = vunpack.c.l.b16 %v950
    %v2015 = vunpack.c.h.b16 %v950
    %v2016 = vunpack.c.l.b16 %v951
    %v2017 = vunpack.c.h.b16 %v951
    %v2018 = vunpack.c.l.b16 %v952
    %v2019 = vunpack.c.h.b16 %v952
    %v2020 = vunpack.c.l.b16 %v953
    %v2021 = vunpack.c.h.b16 %v953
    %v2022 = vunpack.c.l.b16 %v954
    %v2023 = vunpack.c.h.b16 %v954
    %v2024 = vunpack.c.l.b16 %v955
    %v2025 = vunpack.c.h.b16 %v955
    %v2026 = vunpack.c.l.b16 %v956
    %v2027 = vunpack.c.h.b16 %v956
    %v2028 = vunpack.c.l.b16 %v957
    %v2029 = vunpack.c.h.b16 %v957
    %v2030 = vunpack.c.l.b16 %v958
    %v2031 = vunpack.c.h.b16 %v958
    %v2032 = vunpack.c.l.b16 %v959
    %v2033 = vunpack.c.h.b16 %v959
    %v2034 = vunpack.c.l.b16 %v960
    %v2035 = vunpack.c.h.b16 %v960
    %v2036 = vpack.c.b16 %v1658, %v1652
    %v2037 = vpack.c.b16 %v1659, %v1653
    %v2038 = vpack.c.b16 %v1660, %v1654
    %v2039 = vpack.c.b16 %v1661, %v1655
    %v2040 = vpack.c.b16 %v1662, %v1656
    %v2041 = vpack.c.b16 %v1663, %v1657
    %v2042 = vpack.c.b16 %v1670, %v1664
    %v2043 = vpack.c.b16 %v1671, %v1665
    %v2044 = vpack.c.b16 %v1672, %v1666
    %v2045 = vpack.c.b16 %v1673, %v1667
    %v2046 = vpack.c.b16 %v1674, %v1668
    %v2047 = vpack.c.b16 %v1675, %v1669
    %v2048 = vpack.c.b16 %v1682, %v1676
    %v2049 = vpack.c.b16 %v1683, %v1677
    %v2050 = vpack.c.b16 %v1684, %v1678
    %v2051 = vpack.c.b16 %v1685, %v1679
    %v2052 = vpack.c.b16 %v1686, %v1680
    %v2053 = vpack.c.b16 %v1687, %v1681
    %v2054 = vpack.c.b16 %v1694, %v1688
    %v2055 = vpack.c.b16 %v1695, %v1689
    %v2056 = vpack.c.b16 %v1696, %v1690
    %v2057 = vpack.c.b16 %v1697, %v1691
    %v2058 = vpack.c.b16 %v1698, %v1692
    %v2059 = vpack.c.b16 %v1699, %v1693
    %v2060 = vpack.c.b16 %v1706, %v1700
    %v2061 = vpack.c.b16 %v1707, %v1701
    %v2062 = vpack.c.b16 %v1708, %v1702
    %v2063 = vpack.c.b16 %v1709, %v1703
    %v2064 = vpack.c.b16 %v1710, %v1704
    %v2065 = vpack.c.b16 %v1711, %v1705
    %v2066 = vpack.c.b16 %v1718, %v1712
    %v2067 = vpack.c.b16 %v1719, %v1713
    %v2068 = vpack.c.b16 %v1720, %v1714
    %v2069 = vpack.c.b16 %v1721, %v1715
    %v2070 = vpack.c.b16 %v1722, %v1716
    %v2071 = vpack.c.b16 %v1723, %v1717
    %v2072 = vpack.c.b16 %v1730, %v1724
    %v2073 = vpack.c.b16 %v1731, %v1725
    %v2074 = vpack.c.b16 %v1732, %v1726
    %v2075 = vpack.c.b16 %v1733, %v1727
    %v2076 = vpack.c.b16 %v1734, %v1728
    %v2077 = vpack.c.b16 %v1735, %v1729
    %v2078 = vpack.c.b16 %v1742, %v1736
    %v2079 = vpack.c.b16 %v1743, %v1737
    %v2080 = vpack.c.b16 %v1744, %v1738
    %v2081 = vpack.c.b16 %v1745, %v1739
    %v2082 = vpack.c.b16 %v1746, %v1740
    %v2083 = vpack.c.b16 %v1747, %v1741
    %v2084 = vpack.c.b16 %v1754, %v1748
    %v2085 = vpack.c.b16 %v1755, %v1749
    %v2086 = vpack.c.b16 %v1756, %v1750
    %v2087 = vpack.c.b16 %v1757, %v1751
    %v2088 = vpack.c.b16 %v1758, %v1752
    %v2089 = vpack.c.b16 %v1759, %v1753
    %v2090 = vpack.c.b16 %v1766, %v1760
    %v2091 = vpack.c.b16 %v1767, %v1761
    %v2092 = vpack.c.b16 %v1768, %v1762
    %v2093 = vpack.c.b16 %v1769, %v1763
    %v2094 = vpack.c.b16 %v1770, %v1764
    %v2095 = vpack.c.b16 %v1771, %v1765
    %v2096 = vpack.c.b16 %v1778, %v1772
    %v2097 = vpack.c.b16 %v1779, %v1773
    %v2098 = vpack.c.b16 %v1780, %v1774
    %v2099 = vpack.c.b16 %v1781, %v1775
    %v2100 = vpack.c.b16 %v1782, %v1776
    %v2101 = vpack.c.b16 %v1783, %v1777
    %v2102 = vpack.c.b16 %v1790, %v1784
    %v2103 = vpack.c.b16 %v1791, %v1785
    %v2104 = vpack.c.b16 %v1792, %v1786
    %v2105 = vpack.c.b16 %v1793, %v1787
    %v2106 = vpack.c.b16 %v1794, %v1788
    %v2107 = vpack.c.b16 %v1795, %v1789
    %v2108 = vpack.c.b16 %v1802, %v1796
    %v2109 = vpack.c.b16 %v1803, %v1797
    %v2110 = vpack.c.b16 %v1804, %v1798
    %v2111 = vpack.c.b16 %v1805, %v1799
    %v2112 = vpack.c.b16 %v1806, %v1800
    %v2113 = vpack.c.b16 %v1807, %v1801
    %v2114 = vpack.c.b16 %v1814, %v1808
    %v2115 = vpack.c.b16 %v1815, %v1809
    %v2116 = vpack.c.b16 %v1816, %v1810
    %v2117 = vpack.c.b16 %v1817, %v1811
    %v2118 = vpack.c.b16 %v1818, %v1812
    %v2119 = vpack.c.b16 %v1819, %v1813
    %v2120 = vpack.c.b16 %v1826, %v1820
    %v2121 = vpack.c.b16 %v1827, %v1821
    %v2122 = vpack.c.b16 %v1828, %v1822
    %v2123 = vpack.c.b16 %v1829, %v1823
    %v2124 = vpack.c.b16 %v1830, %v1824
    %v2125 = vpack.c.b16 %v1831, %v1825
    %v2126 = vpack.c.b16 %v1838, %v1832
    %v2127 = vpack.c.b16 %v1839, %v1833
    %v2128 = vpack.c.b16 %v1840, %v1834
    %v2129 = vpack.c.b16 %v1841, %v1835
    %v2130 = vpack.c.b16 %v1842, %v1836
    %v2131 = vpack.c.b16 %v1843, %v1837
    %v2132 = vpack.c.b16 %v1850, %v1844
    %v2133 = vpack.c.b16 %v1851, %v1845
    %v2134 = vpack.c.b16 %v1852, %v1846
    %v2135 = vpack.c.b16 %v1853, %v1847
    %v2136 = vpack.c.b16 %v1854, %v1848
    %v2137 = vpack.c.b16 %v1855, %v1849
    %v2138 = vpack.c.b16 %v1862, %v1856
    %v2139 = vpack.c.b16 %v1863, %v1857
    %v2140 = vpack.c.b16 %v1864, %v1858
    %v2141 = vpack.c.b16 %v1865, %v1859
    %v2142 = vpack.c.b16 %v1866, %v1860
    %v2143 = vpack.c.b16 %v1867, %v1861
    %v2144 = vpack.c.b16 %v1874, %v1868
    %v2145 = vpack.c.b16 %v1875, %v1869
    %v2146 = vpack.c.b16 %v1876, %v1870
    %v2147 = vpack.c.b16 %v1877, %v1871
    %v2148 = vpack.c.b16 %v1878, %v1872
    %v2149 = vpack.c.b16 %v1879, %v1873
    %v2150 = vpack.c.b16 %v1886, %v1880
    %v2151 = vpack.c.b16 %v1887, %v1881
    %v2152 = vpack.c.b16 %v1888, %v1882
    %v2153 = vpack.c.b16 %v1889, %v1883
    %v2154 = vpack.c.b16 %v1890, %v1884
    %v2155 = vpack.c.b16 %v1891, %v1885
    %v2156 = vpack.c.b16 %v1898, %v1892
    %v2157 = vpack.c.b16 %v1899, %v1893
    %v2158 = vpack.c.b16 %v1900, %v1894
    %v2159 = vpack.c.b16 %v1901, %v1895
    %v2160 = vpack.c.b16 %v1902, %v1896
    %v2161 = vpack.c.b16 %v1903, %v1897
    %v2162 = vpack.c.b16 %v1910, %v1904
    %v2163 = vpack.c.b16 %v1911, %v1905
    %v2164 = vpack.c.b16 %v1912, %v1906
    %v2165 = vpack.c.b16 %v1913, %v1907
    %v2166 = vpack.c.b16 %v1914, %v1908
    %v2167 = vpack.c.b16 %v1915, %v1909
    %v2168 = vpack.c.b16 %v1922, %v1916
    %v2169 = vpack.c.b16 %v1923, %v1917
    %v2170 = vpack.c.b16 %v1924, %v1918
    %v2171 = vpack.c.b16 %v1925, %v1919
    %v2172 = vpack.c.b16 %v1926, %v1920
    %v2173 = vpack.c.b16 %v1927, %v1921
    %v2174 = vpack.c.b16 %v1934, %v1928
    %v2175 = vpack.c.b16 %v1935, %v1929
    %v2176 = vpack.c.b16 %v1936, %v1930
    %v2177 = vpack.c.b16 %v1937, %v1931
    %v2178 = vpack.c.b16 %v1938, %v1932
    %v2179 = vpack.c.b16 %v1939, %v1933
    %v2180 = vpack.c.b16 %v1946, %v1940
    %v2181 = vpack.c.b16 %v1947, %v1941
    %v2182 = vpack.c.b16 %v1948, %v1942
    %v2183 = vpack.c.b16 %v1949, %v1943
    %v2184 = vpack.c.b16 %v1950, %v1944
    %v2185 = vpack.c.b16 %v1951, %v1945
    %v2186 = vpack.c.b16 %v1958, %v1952
    %v2187 = vpack.c.b16 %v1959, %v1953
    %v2188 = vpack.c.b16 %v1960, %v1954
    %v2189 = vpack.c.b16 %v1961, %v1955
    %v2190 = vpack.c.b16 %v1962, %v1956
    %v2191 = vpack.c.b16 %v1963, %v1957
    %v2192 = vpack.c.b16 %v1970, %v1964
    %v2193 = vpack.c.b16 %v1971, %v1965
    %v2194 = vpack.c.b16 %v1972, %v1966
    %v2195 = vpack.c.b16 %v1973, %v1967
    %v2196 = vpack.c.b16 %v1974, %v1968
    %v2197 = vpack.c.b16 %v1975, %v1969
    %v2198 = vpack.c.b16 %v1982, %v1976
    %v2199 = vpack.c.b16 %v1983, %v1977
    %v2200 = vpack.c.b16 %v1984, %v1978
    %v2201 = vpack.c.b16 %v1985, %v1979
    %v2202 = vpack.c.b16 %v1986, %v1980
    %v2203 = vpack.c.b16 %v1987, %v1981
    %v2204 = vpack.c.b16 %v1994, %v1988
    %v2205 = vpack.c.b16 %v1995, %v1989
    %v2206 = vpack.c.b16 %v1996, %v1990
    %v2207 = vpack.c.b16 %v1997, %v1991
    %v2208 = vpack.c.b16 %v1998, %v1992
    %v2209 = vpack.c.b16 %v1999, %v1993
    %v2210 = vpack.c.b16 %v2006, %v2000
    %v2211 = vpack.c.b16 %v2007, %v2001
    %v2212 = vpack.c.b16 %v2008, %v2002
    %v2213 = vpack.c.b16 %v2009, %v2003
    %v2214 = vpack.c.b16 %v2010, %v2004
    %v2215 = vpack.c.b16 %v2011, %v2005
    %v2216 = vpack.c.b16 %v2018, %v2012
    %v2217 = vpack.c.b16 %v2019, %v2013
    %v2218 = vpack.c.b16 %v2020, %v2014
    %v2219 = vpack.c.b16 %v2021, %v2015
    %v2220 = vpack.c.b16 %v2022, %v2016
    %v2221 = vpack.c.b16 %v2023, %v2017
    %v2222 = vpack.c.b16 %v2030, %v2024
    %v2223 = vpack.c.b16 %v2031, %v2025
    %v2224 = vpack.c.b16 %v2032, %v2026
    %v2225 = vpack.c.b16 %v2033, %v2027
    %v2226 = vpack.c.b16 %v2034, %v2028
    %v2227 = vpack.c.b16 %v2035, %v2029
    %2420 = vmatpush.bf16.msra.mxu0 %v2078
    %2421 = vmatpush.bf16.msra.mxu0 %v2072
    %2422 = vmatpush.bf16.msra.mxu0 %v2066
    %2423 = vmatpush.bf16.msra.mxu0 %v2060
    %2424 = vmatpush.bf16.msra.mxu0 %v2054
    %2425 = vmatpush.bf16.msra.mxu0 %v2048
    %2426 = vmatpush.bf16.msra.mxu0 %v2042
    %2427 = vmatpush.bf16.msra.mxu0 %v2036
    %2428 = vmatmul.bf16.gmra.mxu0 %v1452
    %v2429 = vpop.f32.mrf.mxu0
    %v2430 = vadd.f32 %v963, %v2429
    %v2431 = vpop.f32.mrf.mxu0
    %2432 = vdwg.mxu0
    %2433 = vmatpush.bf16.msra.mxu0 %v2126
    %2434 = vmatpush.bf16.msra.mxu0 %v2120
    %2435 = vmatpush.bf16.msra.mxu0 %v2114
    %2436 = vmatpush.bf16.msra.mxu0 %v2108
    %2437 = vmatpush.bf16.msra.mxu0 %v2102
    %2438 = vmatpush.bf16.msra.mxu0 %v2096
    %2439 = vmatpush.bf16.msra.mxu0 %v2090
    %2440 = vmatpush.bf16.msra.mxu0 %v2084
    %2441 = vmatmul.bf16.gmra.mxu0 %v1453
    %v2442 = vpop.f32.mrf.mxu0
    %v2443 = vadd.f32 %v2430, %v2442
    %v2444 = vpop.f32.mrf.mxu0
    %2445 = vdwg.mxu0
    %2446 = vmatpush.bf16.msra.mxu0 %v2174
    %2447 = vmatpush.bf16.msra.mxu0 %v2168
    %2448 = vmatpush.bf16.msra.mxu0 %v2162
    %2449 = vmatpush.bf16.msra.mxu0 %v2156
    %2450 = vmatpush.bf16.msra.mxu0 %v2150
    %2451 = vmatpush.bf16.msra.mxu0 %v2144
    %2452 = vmatpush.bf16.msra.mxu0 %v2138
    %2453 = vmatpush.bf16.msra.mxu0 %v2132
    %2454 = vmatmul.bf16.gmra.mxu0 %v1454
    %v2455 = vpop.f32.mrf.mxu0
    %v2456 = vadd.f32 %v2443, %v2455
    %v2457 = vpop.f32.mrf.mxu0
    %2458 = vdwg.mxu0
    %2459 = vmatpush.bf16.msra.mxu0 %v2222
    %2460 = vmatpush.bf16.msra.mxu0 %v2216
    %2461 = vmatpush.bf16.msra.mxu0 %v2210
    %2462 = vmatpush.bf16.msra.mxu0 %v2204
    %2463 = vmatpush.bf16.msra.mxu0 %v2198
    %2464 = vmatpush.bf16.msra.mxu0 %v2192
    %2465 = vmatpush.bf16.msra.mxu0 %v2186
    %2466 = vmatpush.bf16.msra.mxu0 %v2180
    %2467 = vmatmul.bf16.gmra.mxu0 %v1455
    %v2468 = vpop.f32.mrf.mxu0
    %v2469 = vadd.f32 %v2456, %v2468
    %v2470 = vpop.f32.mrf.mxu0
    %2471 = vdwg.mxu0
    %2472 = vmatpush.bf16.msra.mxu0 %v2079
    %2473 = vmatpush.bf16.msra.mxu0 %v2073
    %2474 = vmatpush.bf16.msra.mxu0 %v2067
    %2475 = vmatpush.bf16.msra.mxu0 %v2061
    %2476 = vmatpush.bf16.msra.mxu0 %v2055
    %2477 = vmatpush.bf16.msra.mxu0 %v2049
    %2478 = vmatpush.bf16.msra.mxu0 %v2043
    %2479 = vmatpush.bf16.msra.mxu0 %v2037
    %2480 = vmatmul.bf16.gmra.mxu0 %v1452
    %v2481 = vpop.f32.mrf.mxu0
    %v2482 = vadd.f32 %v964, %v2481
    %v2483 = vpop.f32.mrf.mxu0
    %2484 = vdwg.mxu0
    %2485 = vmatpush.bf16.msra.mxu0 %v2127
    %2486 = vmatpush.bf16.msra.mxu0 %v2121
    %2487 = vmatpush.bf16.msra.mxu0 %v2115
    %2488 = vmatpush.bf16.msra.mxu0 %v2109
    %2489 = vmatpush.bf16.msra.mxu0 %v2103
    %2490 = vmatpush.bf16.msra.mxu0 %v2097
    %2491 = vmatpush.bf16.msra.mxu0 %v2091
    %2492 = vmatpush.bf16.msra.mxu0 %v2085
    %2493 = vmatmul.bf16.gmra.mxu0 %v1453
    %v2494 = vpop.f32.mrf.mxu0
    %v2495 = vadd.f32 %v2482, %v2494
    %v2496 = vpop.f32.mrf.mxu0
    %2497 = vdwg.mxu0
    %2498 = vmatpush.bf16.msra.mxu0 %v2175
    %2499 = vmatpush.bf16.msra.mxu0 %v2169
    %2500 = vmatpush.bf16.msra.mxu0 %v2163
    %2501 = vmatpush.bf16.msra.mxu0 %v2157
    %2502 = vmatpush.bf16.msra.mxu0 %v2151
    %2503 = vmatpush.bf16.msra.mxu0 %v2145
    %2504 = vmatpush.bf16.msra.mxu0 %v2139
    %2505 = vmatpush.bf16.msra.mxu0 %v2133
    %2506 = vmatmul.bf16.gmra.mxu0 %v1454
    %v2507 = vpop.f32.mrf.mxu0
    %v2508 = vadd.f32 %v2495, %v2507
    %v2509 = vpop.f32.mrf.mxu0
    %2510 = vdwg.mxu0
    %2511 = vmatpush.bf16.msra.mxu0 %v2223
    %2512 = vmatpush.bf16.msra.mxu0 %v2217
    %2513 = vmatpush.bf16.msra.mxu0 %v2211
    %2514 = vmatpush.bf16.msra.mxu0 %v2205
    %2515 = vmatpush.bf16.msra.mxu0 %v2199
    %2516 = vmatpush.bf16.msra.mxu0 %v2193
    %2517 = vmatpush.bf16.msra.mxu0 %v2187
    %2518 = vmatpush.bf16.msra.mxu0 %v2181
    %2519 = vmatmul.bf16.gmra.mxu0 %v1455
    %v2520 = vpop.f32.mrf.mxu0
    %v2521 = vadd.f32 %v2508, %v2520
    %v2522 = vpop.f32.mrf.mxu0
    %2523 = vdwg.mxu0
    %2524 = vmatpush.bf16.msra.mxu0 %v2080
    %2525 = vmatpush.bf16.msra.mxu0 %v2074
    %2526 = vmatpush.bf16.msra.mxu0 %v2068
    %2527 = vmatpush.bf16.msra.mxu0 %v2062
    %2528 = vmatpush.bf16.msra.mxu0 %v2056
    %2529 = vmatpush.bf16.msra.mxu0 %v2050
    %2530 = vmatpush.bf16.msra.mxu0 %v2044
    %2531 = vmatpush.bf16.msra.mxu0 %v2038
    %2532 = vmatmul.bf16.gmra.mxu0 %v1452
    %v2533 = vpop.f32.mrf.mxu0
    %v2534 = vadd.f32 %v965, %v2533
    %v2535 = vpop.f32.mrf.mxu0
    %2536 = vdwg.mxu0
    %2537 = vmatpush.bf16.msra.mxu0 %v2128
    %2538 = vmatpush.bf16.msra.mxu0 %v2122
    %2539 = vmatpush.bf16.msra.mxu0 %v2116
    %2540 = vmatpush.bf16.msra.mxu0 %v2110
    %2541 = vmatpush.bf16.msra.mxu0 %v2104
    %2542 = vmatpush.bf16.msra.mxu0 %v2098
    %2543 = vmatpush.bf16.msra.mxu0 %v2092
    %2544 = vmatpush.bf16.msra.mxu0 %v2086
    %2545 = vmatmul.bf16.gmra.mxu0 %v1453
    %v2546 = vpop.f32.mrf.mxu0
    %v2547 = vadd.f32 %v2534, %v2546
    %v2548 = vpop.f32.mrf.mxu0
    %2549 = vdwg.mxu0
    %2550 = vmatpush.bf16.msra.mxu0 %v2176
    %2551 = vmatpush.bf16.msra.mxu0 %v2170
    %2552 = vmatpush.bf16.msra.mxu0 %v2164
    %2553 = vmatpush.bf16.msra.mxu0 %v2158
    %2554 = vmatpush.bf16.msra.mxu0 %v2152
    %2555 = vmatpush.bf16.msra.mxu0 %v2146
    %2556 = vmatpush.bf16.msra.mxu0 %v2140
    %2557 = vmatpush.bf16.msra.mxu0 %v2134
    %2558 = vmatmul.bf16.gmra.mxu0 %v1454
    %v2559 = vpop.f32.mrf.mxu0
    %v2560 = vadd.f32 %v2547, %v2559
    %v2561 = vpop.f32.mrf.mxu0
    %2562 = vdwg.mxu0
    %2563 = vmatpush.bf16.msra.mxu0 %v2224
    %2564 = vmatpush.bf16.msra.mxu0 %v2218
    %2565 = vmatpush.bf16.msra.mxu0 %v2212
    %2566 = vmatpush.bf16.msra.mxu0 %v2206
    %2567 = vmatpush.bf16.msra.mxu0 %v2200
    %2568 = vmatpush.bf16.msra.mxu0 %v2194
    %2569 = vmatpush.bf16.msra.mxu0 %v2188
    %2570 = vmatpush.bf16.msra.mxu0 %v2182
    %2571 = vmatmul.bf16.gmra.mxu0 %v1455
    %v2572 = vpop.f32.mrf.mxu0
    %v2573 = vadd.f32 %v2560, %v2572
    %v2574 = vpop.f32.mrf.mxu0
    %2575 = vdwg.mxu0
    %2576 = vmatpush.bf16.msra.mxu0 %v2081
    %2577 = vmatpush.bf16.msra.mxu0 %v2075
    %2578 = vmatpush.bf16.msra.mxu0 %v2069
    %2579 = vmatpush.bf16.msra.mxu0 %v2063
    %2580 = vmatpush.bf16.msra.mxu0 %v2057
    %2581 = vmatpush.bf16.msra.mxu0 %v2051
    %2582 = vmatpush.bf16.msra.mxu0 %v2045
    %2583 = vmatpush.bf16.msra.mxu0 %v2039
    %2584 = vmatmul.bf16.gmra.mxu0 %v1452
    %v2585 = vpop.f32.mrf.mxu0
    %v2586 = vadd.f32 %v966, %v2585
    %v2587 = vpop.f32.mrf.mxu0
    %2588 = vdwg.mxu0
    %2589 = vmatpush.bf16.msra.mxu0 %v2129
    %2590 = vmatpush.bf16.msra.mxu0 %v2123
    %2591 = vmatpush.bf16.msra.mxu0 %v2117
    %2592 = vmatpush.bf16.msra.mxu0 %v2111
    %2593 = vmatpush.bf16.msra.mxu0 %v2105
    %2594 = vmatpush.bf16.msra.mxu0 %v2099
    %2595 = vmatpush.bf16.msra.mxu0 %v2093
    %2596 = vmatpush.bf16.msra.mxu0 %v2087
    %2597 = vmatmul.bf16.gmra.mxu0 %v1453
    %v2598 = vpop.f32.mrf.mxu0
    %v2599 = vadd.f32 %v2586, %v2598
    %v2600 = vpop.f32.mrf.mxu0
    %2601 = vdwg.mxu0
    %2602 = vmatpush.bf16.msra.mxu0 %v2177
    %2603 = vmatpush.bf16.msra.mxu0 %v2171
    %2604 = vmatpush.bf16.msra.mxu0 %v2165
    %2605 = vmatpush.bf16.msra.mxu0 %v2159
    %2606 = vmatpush.bf16.msra.mxu0 %v2153
    %2607 = vmatpush.bf16.msra.mxu0 %v2147
    %2608 = vmatpush.bf16.msra.mxu0 %v2141
    %2609 = vmatpush.bf16.msra.mxu0 %v2135
    %2610 = vmatmul.bf16.gmra.mxu0 %v1454
    %v2611 = vpop.f32.mrf.mxu0
    %v2612 = vadd.f32 %v2599, %v2611
    %v2613 = vpop.f32.mrf.mxu0
    %2614 = vdwg.mxu0
    %2615 = vmatpush.bf16.msra.mxu0 %v2225
    %2616 = vmatpush.bf16.msra.mxu0 %v2219
    %2617 = vmatpush.bf16.msra.mxu0 %v2213
    %2618 = vmatpush.bf16.msra.mxu0 %v2207
    %2619 = vmatpush.bf16.msra.mxu0 %v2201
    %2620 = vmatpush.bf16.msra.mxu0 %v2195
    %2621 = vmatpush.bf16.msra.mxu0 %v2189
    %2622 = vmatpush.bf16.msra.mxu0 %v2183
    %2623 = vmatmul.bf16.gmra.mxu0 %v1455
    %v2624 = vpop.f32.mrf.mxu0
    %v2625 = vadd.f32 %v2612, %v2624
    %v2626 = vpop.f32.mrf.mxu0
    %2627 = vdwg.mxu0
    %2628 = vmatpush.bf16.msra.mxu0 %v2082
    %2629 = vmatpush.bf16.msra.mxu0 %v2076
    %2630 = vmatpush.bf16.msra.mxu0 %v2070
    %2631 = vmatpush.bf16.msra.mxu0 %v2064
    %2632 = vmatpush.bf16.msra.mxu0 %v2058
    %2633 = vmatpush.bf16.msra.mxu0 %v2052
    %2634 = vmatpush.bf16.msra.mxu0 %v2046
    %2635 = vmatpush.bf16.msra.mxu0 %v2040
    %2636 = vmatmul.bf16.gmra.mxu0 %v1452
    %v2637 = vpop.f32.mrf.mxu0
    %v2638 = vadd.f32 %v967, %v2637
    %v2639 = vpop.f32.mrf.mxu0
    %2640 = vdwg.mxu0
    %2641 = vmatpush.bf16.msra.mxu0 %v2130
    %2642 = vmatpush.bf16.msra.mxu0 %v2124
    %2643 = vmatpush.bf16.msra.mxu0 %v2118
    %2644 = vmatpush.bf16.msra.mxu0 %v2112
    %2645 = vmatpush.bf16.msra.mxu0 %v2106
    %2646 = vmatpush.bf16.msra.mxu0 %v2100
    %2647 = vmatpush.bf16.msra.mxu0 %v2094
    %2648 = vmatpush.bf16.msra.mxu0 %v2088
    %2649 = vmatmul.bf16.gmra.mxu0 %v1453
    %v2650 = vpop.f32.mrf.mxu0
    %v2651 = vadd.f32 %v2638, %v2650
    %v2652 = vpop.f32.mrf.mxu0
    %2653 = vdwg.mxu0
    %2654 = vmatpush.bf16.msra.mxu0 %v2178
    %2655 = vmatpush.bf16.msra.mxu0 %v2172
    %2656 = vmatpush.bf16.msra.mxu0 %v2166
    %2657 = vmatpush.bf16.msra.mxu0 %v2160
    %2658 = vmatpush.bf16.msra.mxu0 %v2154
    %2659 = vmatpush.bf16.msra.mxu0 %v2148
    %2660 = vmatpush.bf16.msra.mxu0 %v2142
    %2661 = vmatpush.bf16.msra.mxu0 %v2136
    %2662 = vmatmul.bf16.gmra.mxu0 %v1454
    %v2663 = vpop.f32.mrf.mxu0
    %v2664 = vadd.f32 %v2651, %v2663
    %v2665 = vpop.f32.mrf.mxu0
    %2666 = vdwg.mxu0
    %2667 = vmatpush.bf16.msra.mxu0 %v2226
    %2668 = vmatpush.bf16.msra.mxu0 %v2220
    %2669 = vmatpush.bf16.msra.mxu0 %v2214
    %2670 = vmatpush.bf16.msra.mxu0 %v2208
    %2671 = vmatpush.bf16.msra.mxu0 %v2202
    %2672 = vmatpush.bf16.msra.mxu0 %v2196
    %2673 = vmatpush.bf16.msra.mxu0 %v2190
    %2674 = vmatpush.bf16.msra.mxu0 %v2184
    %2675 = vmatmul.bf16.gmra.mxu0 %v1455
    %v2676 = vpop.f32.mrf.mxu0
    %v2677 = vadd.f32 %v2664, %v2676
    %v2678 = vpop.f32.mrf.mxu0
    %2679 = vdwg.mxu0
    %2680 = vmatpush.bf16.msra.mxu0 %v2083
    %2681 = vmatpush.bf16.msra.mxu0 %v2077
    %2682 = vmatpush.bf16.msra.mxu0 %v2071
    %2683 = vmatpush.bf16.msra.mxu0 %v2065
    %2684 = vmatpush.bf16.msra.mxu0 %v2059
    %2685 = vmatpush.bf16.msra.mxu0 %v2053
    %2686 = vmatpush.bf16.msra.mxu0 %v2047
    %2687 = vmatpush.bf16.msra.mxu0 %v2041
    %2688 = vmatmul.bf16.gmra.mxu0 %v1452
    %v2689 = vpop.f32.mrf.mxu0
    %v2690 = vadd.f32 %v968, %v2689
    %v2691 = vpop.f32.mrf.mxu0
    %2692 = vdwg.mxu0
    %2693 = vmatpush.bf16.msra.mxu0 %v2131
    %2694 = vmatpush.bf16.msra.mxu0 %v2125
    %2695 = vmatpush.bf16.msra.mxu0 %v2119
    %2696 = vmatpush.bf16.msra.mxu0 %v2113
    %2697 = vmatpush.bf16.msra.mxu0 %v2107
    %2698 = vmatpush.bf16.msra.mxu0 %v2101
    %2699 = vmatpush.bf16.msra.mxu0 %v2095
    %2700 = vmatpush.bf16.msra.mxu0 %v2089
    %2701 = vmatmul.bf16.gmra.mxu0 %v1453
    %v2702 = vpop.f32.mrf.mxu0
    %v2703 = vadd.f32 %v2690, %v2702
    %v2704 = vpop.f32.mrf.mxu0
    %2705 = vdwg.mxu0
    %2706 = vmatpush.bf16.msra.mxu0 %v2179
    %2707 = vmatpush.bf16.msra.mxu0 %v2173
    %2708 = vmatpush.bf16.msra.mxu0 %v2167
    %2709 = vmatpush.bf16.msra.mxu0 %v2161
    %2710 = vmatpush.bf16.msra.mxu0 %v2155
    %2711 = vmatpush.bf16.msra.mxu0 %v2149
    %2712 = vmatpush.bf16.msra.mxu0 %v2143
    %2713 = vmatpush.bf16.msra.mxu0 %v2137
    %2714 = vmatmul.bf16.gmra.mxu0 %v1454
    %v2715 = vpop.f32.mrf.mxu0
    %v2716 = vadd.f32 %v2703, %v2715
    %v2717 = vpop.f32.mrf.mxu0
    %2718 = vdwg.mxu0
    %2719 = vmatpush.bf16.msra.mxu0 %v2227
    %2720 = vmatpush.bf16.msra.mxu0 %v2221
    %2721 = vmatpush.bf16.msra.mxu0 %v2215
    %2722 = vmatpush.bf16.msra.mxu0 %v2209
    %2723 = vmatpush.bf16.msra.mxu0 %v2203
    %2724 = vmatpush.bf16.msra.mxu0 %v2197
    %2725 = vmatpush.bf16.msra.mxu0 %v2191
    %2726 = vmatpush.bf16.msra.mxu0 %v2185
    %2727 = vmatmul.bf16.gmra.mxu0 %v1455
    %v2728 = vpop.f32.mrf.mxu0
    %v2729 = vadd.f32 %v2716, %v2728
    %v2730 = vpop.f32.mrf.mxu0
    %2731 = vdwg.mxu0
    %v2732 = vmax.f32 %v2469, 0.0
    %v2733 = vmax.f32 %v2521, 0.0
    %v2734 = vmax.f32 %v2573, 0.0
    %v2735 = vmax.f32 %v2625, 0.0
    %v2736 = vmax.f32 %v2677, 0.0
    %v2737 = vmax.f32 %v2729, 0.0
    %v2738 = vpack.c.bf16 %v2732, %v2732
    %v2739 = vpack.c.bf16 %v2733, %v2733
    %v2740 = vpack.c.bf16 %v2734, %v2734
    %v2741 = vpack.c.bf16 %v2735, %v2735
    %v2742 = vpack.c.bf16 %v2736, %v2736
    %v2743 = vpack.c.bf16 %v2737, %v2737
    %v2744 = vld [vmem:[#allocation5] sm:$0xf]
    %v2745 = vld [vmem:[#allocation5 + $0x4] sm:$0xf]
    %v2746 = vld [vmem:[#allocation5 + $0x8] sm:$0xf]
    %v2747 = vld [vmem:[#allocation5 + $0xc] sm:$0xf]
    %v2748 = vld [vmem:[#allocation5 + $0x10] sm:$0xf]
    %v2749 = vld [vmem:[#allocation5 + $0x14] sm:$0xf]
    %v2750 = vld [vmem:[#allocation5 + $0x18] sm:$0xf]
    %v2751 = vld [vmem:[#allocation5 + $0x1c] sm:$0xf]
    %v2752 = vld [vmem:[#allocation5 + $0x20] sm:$0xf]
    %v2753 = vld [vmem:[#allocation5 + $0x24] sm:$0xf]
    %v2754 = vld [vmem:[#allocation5 + $0x28] sm:$0xf]
    %v2755 = vld [vmem:[#allocation5 + $0x2c] sm:$0xf]
    %v2756 = vld [vmem:[#allocation5 + $0x30] sm:$0xf]
    %v2757 = vld [vmem:[#allocation5 + $0x34] sm:$0xf]
    %v2758 = vld [vmem:[#allocation5 + $0x38] sm:$0xf]
    %v2759 = vld [vmem:[#allocation5 + $0x3c] sm:$0xf]
    %v2760 = vld [vmem:[#allocation5 + $0x40] sm:$0xf]
    %v2761 = vld [vmem:[#allocation5 + $0x44] sm:$0xf]
    %v2762 = vld [vmem:[#allocation5 + $0x48] sm:$0xf]
    %v2763 = vld [vmem:[#allocation5 + $0x4c] sm:$0xf]
    %v2764 = vld [vmem:[#allocation5 + $0x50] sm:$0xf]
    %v2765 = vld [vmem:[#allocation5 + $0x54] sm:$0xf]
    %v2766 = vld [vmem:[#allocation5 + $0x58] sm:$0xf]
    %v2767 = vld [vmem:[#allocation5 + $0x5c] sm:$0xf]
    %v2768 = vld [vmem:[#allocation5 + $0x60] sm:$0xf]
    %v2769 = vld [vmem:[#allocation5 + $0x64] sm:$0xf]
    %v2770 = vld [vmem:[#allocation5 + $0x68] sm:$0xf]
    %v2771 = vld [vmem:[#allocation5 + $0x6c] sm:$0xf]
    %v2772 = vld [vmem:[#allocation5 + $0x70] sm:$0xf]
    %v2773 = vld [vmem:[#allocation5 + $0x74] sm:$0xf]
    %v2774 = vld [vmem:[#allocation5 + $0x78] sm:$0xf]
    %v2775 = vld [vmem:[#allocation5 + $0x7c] sm:$0xf]
    %v2776 = vld [vmem:[#allocation5 + $0x80] sm:$0xf]
    %v2777 = vld [vmem:[#allocation5 + $0x84] sm:$0xf]
    %v2778 = vld [vmem:[#allocation5 + $0x88] sm:$0xf]
    %v2779 = vld [vmem:[#allocation5 + $0x8c] sm:$0xf]
    %v2780 = vld [vmem:[#allocation5 + $0x90] sm:$0xf]
    %v2781 = vld [vmem:[#allocation5 + $0x94] sm:$0xf]
    %v2782 = vld [vmem:[#allocation5 + $0x98] sm:$0xf]
    %v2783 = vld [vmem:[#allocation5 + $0x9c] sm:$0xf]
    %v2784 = vld [vmem:[#allocation5 + $0xa0] sm:$0xf]
    %v2785 = vld [vmem:[#allocation5 + $0xa4] sm:$0xf]
    %v2786 = vld [vmem:[#allocation5 + $0xa8] sm:$0xf]
    %v2787 = vld [vmem:[#allocation5 + $0xac] sm:$0xf]
    %v2788 = vld [vmem:[#allocation5 + $0xb0] sm:$0xf]
    %v2789 = vld [vmem:[#allocation5 + $0xb4] sm:$0xf]
    %v2790 = vld [vmem:[#allocation5 + $0xb8] sm:$0xf]
    %v2791 = vld [vmem:[#allocation5 + $0xbc] sm:$0xf]
    %v2792 = vld [vmem:[#allocation5 + $0xc0] sm:$0xf]
    %v2793 = vld [vmem:[#allocation5 + $0xc4] sm:$0xf]
    %v2794 = vld [vmem:[#allocation5 + $0xc8] sm:$0xf]
    %v2795 = vld [vmem:[#allocation5 + $0xcc] sm:$0xf]
    %v2796 = vld [vmem:[#allocation5 + $0xd0] sm:$0xf]
    %v2797 = vld [vmem:[#allocation5 + $0xd4] sm:$0xf]
    %v2798 = vld [vmem:[#allocation5 + $0xd8] sm:$0xf]
    %v2799 = vld [vmem:[#allocation5 + $0xdc] sm:$0xf]
    %v2800 = vld [vmem:[#allocation5 + $0xe0] sm:$0xf]
    %v2801 = vld [vmem:[#allocation5 + $0xe4] sm:$0xf]
    %v2802 = vld [vmem:[#allocation5 + $0xe8] sm:$0xf]
    %v2803 = vld [vmem:[#allocation5 + $0xec] sm:$0xf]
    %v2804 = vld [vmem:[#allocation5 + $0xf0] sm:$0xf]
    %v2805 = vld [vmem:[#allocation5 + $0xf4] sm:$0xf]
    %v2806 = vld [vmem:[#allocation5 + $0xf8] sm:$0xf]
    %v2807 = vld [vmem:[#allocation5 + $0xfc] sm:$0xf]
    %v2808 = vld [vmem:[#allocation5 + $0x100] sm:$0xf]
    %v2809 = vld [vmem:[#allocation5 + $0x104] sm:$0xf]
    %v2810 = vld [vmem:[#allocation5 + $0x108] sm:$0xf]
    %v2811 = vld [vmem:[#allocation5 + $0x10c] sm:$0xf]
    %v2812 = vld [vmem:[#allocation5 + $0x110] sm:$0xf]
    %v2813 = vld [vmem:[#allocation5 + $0x114] sm:$0xf]
    %v2814 = vld [vmem:[#allocation5 + $0x118] sm:$0xf]
    %v2815 = vld [vmem:[#allocation5 + $0x11c] sm:$0xf]
    %v2816 = vld [vmem:[#allocation5 + $0x120] sm:$0xf]
    %v2817 = vld [vmem:[#allocation5 + $0x124] sm:$0xf]
    %v2818 = vld [vmem:[#allocation5 + $0x128] sm:$0xf]
    %v2819 = vld [vmem:[#allocation5 + $0x12c] sm:$0xf]
    %v2820 = vld [vmem:[#allocation5 + $0x130] sm:$0xf]
    %v2821 = vld [vmem:[#allocation5 + $0x134] sm:$0xf]
    %v2822 = vld [vmem:[#allocation5 + $0x138] sm:$0xf]
    %v2823 = vld [vmem:[#allocation5 + $0x13c] sm:$0xf]
    %v2824 = vld [vmem:[#allocation5 + $0x140] sm:$0xf]
    %v2825 = vld [vmem:[#allocation5 + $0x144] sm:$0xf]
    %v2826 = vld [vmem:[#allocation5 + $0x148] sm:$0xf]
    %v2827 = vld [vmem:[#allocation5 + $0x14c] sm:$0xf]
    %v2828 = vld [vmem:[#allocation5 + $0x150] sm:$0xf]
    %v2829 = vld [vmem:[#allocation5 + $0x154] sm:$0xf]
    %v2830 = vld [vmem:[#allocation5 + $0x158] sm:$0xf]
    %v2831 = vld [vmem:[#allocation5 + $0x15c] sm:$0xf]
    %v2832 = vld [vmem:[#allocation5 + $0x160] sm:$0xf]
    %v2833 = vld [vmem:[#allocation5 + $0x164] sm:$0xf]
    %v2834 = vld [vmem:[#allocation5 + $0x168] sm:$0xf]
    %v2835 = vld [vmem:[#allocation5 + $0x16c] sm:$0xf]
    %v2836 = vld [vmem:[#allocation5 + $0x170] sm:$0xf]
    %v2837 = vld [vmem:[#allocation5 + $0x174] sm:$0xf]
    %v2838 = vld [vmem:[#allocation5 + $0x178] sm:$0xf]
    %v2839 = vld [vmem:[#allocation5 + $0x17c] sm:$0xf]
    %v2840 = vld [vmem:[#allocation7] sm:$0x1]
    %v2842 = vperm.slane %v2840, 0
    %v2940 = vunpack.c.l.b16 %v2744
    %v2941 = vunpack.c.l.b16 %v2745
    %v2942 = vunpack.c.l.b16 %v2746
    %v2943 = vunpack.c.l.b16 %v2747
    %v2944 = vunpack.c.l.b16 %v2748
    %v2945 = vunpack.c.l.b16 %v2749
    %v2946 = vunpack.c.l.b16 %v2750
    %v2947 = vunpack.c.l.b16 %v2751
    %v2948 = vunpack.c.l.b16 %v2752
    %v2949 = vunpack.c.l.b16 %v2753
    %v2950 = vunpack.c.l.b16 %v2754
    %v2951 = vunpack.c.l.b16 %v2755
    %v2952 = vunpack.c.l.b16 %v2756
    %v2953 = vunpack.c.l.b16 %v2757
    %v2954 = vunpack.c.l.b16 %v2758
    %v2955 = vunpack.c.l.b16 %v2759
    %v2956 = vunpack.c.l.b16 %v2760
    %v2957 = vunpack.c.l.b16 %v2761
    %v2958 = vunpack.c.l.b16 %v2762
    %v2959 = vunpack.c.l.b16 %v2763
    %v2960 = vunpack.c.l.b16 %v2764
    %v2961 = vunpack.c.l.b16 %v2765
    %v2962 = vunpack.c.l.b16 %v2766
    %v2963 = vunpack.c.l.b16 %v2767
    %v2964 = vunpack.c.l.b16 %v2768
    %v2965 = vunpack.c.l.b16 %v2769
    %v2966 = vunpack.c.l.b16 %v2770
    %v2967 = vunpack.c.l.b16 %v2771
    %v2968 = vunpack.c.l.b16 %v2772
    %v2969 = vunpack.c.l.b16 %v2773
    %v2970 = vunpack.c.l.b16 %v2774
    %v2971 = vunpack.c.l.b16 %v2775
    %v2972 = vunpack.c.l.b16 %v2776
    %v2973 = vunpack.c.l.b16 %v2777
    %v2974 = vunpack.c.l.b16 %v2778
    %v2975 = vunpack.c.l.b16 %v2779
    %v2976 = vunpack.c.l.b16 %v2780
    %v2977 = vunpack.c.l.b16 %v2781
    %v2978 = vunpack.c.l.b16 %v2782
    %v2979 = vunpack.c.l.b16 %v2783
    %v2980 = vunpack.c.l.b16 %v2784
    %v2981 = vunpack.c.l.b16 %v2785
    %v2982 = vunpack.c.l.b16 %v2786
    %v2983 = vunpack.c.l.b16 %v2787
    %v2984 = vunpack.c.l.b16 %v2788
    %v2985 = vunpack.c.l.b16 %v2789
    %v2986 = vunpack.c.l.b16 %v2790
    %v2987 = vunpack.c.l.b16 %v2791
    %v2988 = vunpack.c.l.b16 %v2792
    %v2989 = vunpack.c.l.b16 %v2793
    %v2990 = vunpack.c.l.b16 %v2794
    %v2991 = vunpack.c.l.b16 %v2795
    %v2992 = vunpack.c.l.b16 %v2796
    %v2993 = vunpack.c.l.b16 %v2797
    %v2994 = vunpack.c.l.b16 %v2798
    %v2995 = vunpack.c.l.b16 %v2799
    %v2996 = vunpack.c.l.b16 %v2800
    %v2997 = vunpack.c.l.b16 %v2801
    %v2998 = vunpack.c.l.b16 %v2802
    %v2999 = vunpack.c.l.b16 %v2803
    %v3000 = vunpack.c.l.b16 %v2804
    %v3001 = vunpack.c.l.b16 %v2805
    %v3002 = vunpack.c.l.b16 %v2806
    %v3003 = vunpack.c.l.b16 %v2807
    %v3004 = vunpack.c.l.b16 %v2808
    %v3005 = vunpack.c.l.b16 %v2809
    %v3006 = vunpack.c.l.b16 %v2810
    %v3007 = vunpack.c.l.b16 %v2811
    %v3008 = vunpack.c.l.b16 %v2812
    %v3009 = vunpack.c.l.b16 %v2813
    %v3010 = vunpack.c.l.b16 %v2814
    %v3011 = vunpack.c.l.b16 %v2815
    %v3012 = vunpack.c.l.b16 %v2816
    %v3013 = vunpack.c.l.b16 %v2817
    %v3014 = vunpack.c.l.b16 %v2818
    %v3015 = vunpack.c.l.b16 %v2819
    %v3016 = vunpack.c.l.b16 %v2820
    %v3017 = vunpack.c.l.b16 %v2821
    %v3018 = vunpack.c.l.b16 %v2822
    %v3019 = vunpack.c.l.b16 %v2823
    %v3020 = vunpack.c.l.b16 %v2824
    %v3021 = vunpack.c.l.b16 %v2825
    %v3022 = vunpack.c.l.b16 %v2826
    %v3023 = vunpack.c.l.b16 %v2827
    %v3024 = vunpack.c.l.b16 %v2828
    %v3025 = vunpack.c.l.b16 %v2829
    %v3026 = vunpack.c.l.b16 %v2830
    %v3027 = vunpack.c.l.b16 %v2831
    %v3028 = vunpack.c.l.b16 %v2832
    %v3029 = vunpack.c.l.b16 %v2833
    %v3030 = vunpack.c.l.b16 %v2834
    %v3031 = vunpack.c.l.b16 %v2835
    %v3032 = vunpack.c.l.b16 %v2836
    %v3033 = vunpack.c.l.b16 %v2837
    %v3034 = vunpack.c.l.b16 %v2838
    %v3035 = vunpack.c.l.b16 %v2839
    %v3036 = vpack.c.b16 %v2941, %v2940
    %v3037 = vpack.c.b16 %v2943, %v2942
    %v3038 = vpack.c.b16 %v2945, %v2944
    %v3039 = vpack.c.b16 %v2947, %v2946
    %v3040 = vpack.c.b16 %v2949, %v2948
    %v3041 = vpack.c.b16 %v2951, %v2950
    %v3042 = vpack.c.b16 %v2953, %v2952
    %v3043 = vpack.c.b16 %v2955, %v2954
    %v3044 = vpack.c.b16 %v2957, %v2956
    %v3045 = vpack.c.b16 %v2959, %v2958
    %v3046 = vpack.c.b16 %v2961, %v2960
    %v3047 = vpack.c.b16 %v2963, %v2962
    %v3048 = vpack.c.b16 %v2965, %v2964
    %v3049 = vpack.c.b16 %v2967, %v2966
    %v3050 = vpack.c.b16 %v2969, %v2968
    %v3051 = vpack.c.b16 %v2971, %v2970
    %v3052 = vpack.c.b16 %v2973, %v2972
    %v3053 = vpack.c.b16 %v2975, %v2974
    %v3054 = vpack.c.b16 %v2977, %v2976
    %v3055 = vpack.c.b16 %v2979, %v2978
    %v3056 = vpack.c.b16 %v2981, %v2980
    %v3057 = vpack.c.b16 %v2983, %v2982
    %v3058 = vpack.c.b16 %v2985, %v2984
    %v3059 = vpack.c.b16 %v2987, %v2986
    %v3060 = vpack.c.b16 %v2989, %v2988
    %v3061 = vpack.c.b16 %v2991, %v2990
    %v3062 = vpack.c.b16 %v2993, %v2992
    %v3063 = vpack.c.b16 %v2995, %v2994
    %v3064 = vpack.c.b16 %v2997, %v2996
    %v3065 = vpack.c.b16 %v2999, %v2998
    %v3066 = vpack.c.b16 %v3001, %v3000
    %v3067 = vpack.c.b16 %v3003, %v3002
    %v3068 = vpack.c.b16 %v3005, %v3004
    %v3069 = vpack.c.b16 %v3007, %v3006
    %v3070 = vpack.c.b16 %v3009, %v3008
    %v3071 = vpack.c.b16 %v3011, %v3010
    %v3072 = vpack.c.b16 %v3013, %v3012
    %v3073 = vpack.c.b16 %v3015, %v3014
    %v3074 = vpack.c.b16 %v3017, %v3016
    %v3075 = vpack.c.b16 %v3019, %v3018
    %v3076 = vpack.c.b16 %v3021, %v3020
    %v3077 = vpack.c.b16 %v3023, %v3022
    %v3078 = vpack.c.b16 %v3025, %v3024
    %v3079 = vpack.c.b16 %v3027, %v3026
    %v3080 = vpack.c.b16 %v3029, %v3028
    %v3081 = vpack.c.b16 %v3031, %v3030
    %v3082 = vpack.c.b16 %v3033, %v3032
    %v3083 = vpack.c.b16 %v3035, %v3034
    %3132 = vmatpush.bf16.msra.mxu0 %v3043
    %3133 = vmatpush.bf16.msra.mxu0 %v3042
    %3134 = vmatpush.bf16.msra.mxu0 %v3041
    %3135 = vmatpush.bf16.msra.mxu0 %v3040
    %3136 = vmatpush.bf16.msra.mxu0 %v3039
    %3137 = vmatpush.bf16.msra.mxu0 %v3038
    %3138 = vmatpush.bf16.msra.mxu0 %v3037
    %3139 = vmatpush.bf16.msra.mxu0 %v3036
    %3140 = vmatmul.bf16.gmra.mxu0 %v2738
    %v3141 = vpop.f32.mrf.mxu0
    %v3142 = vadd.f32 %v2842, %v3141
    %v3143 = vpop.f32.mrf.mxu0
    %3144 = vdwg.mxu0
    %3145 = vmatpush.bf16.msra.mxu0 %v3051
    %3146 = vmatpush.bf16.msra.mxu0 %v3050
    %3147 = vmatpush.bf16.msra.mxu0 %v3049
    %3148 = vmatpush.bf16.msra.mxu0 %v3048
    %3149 = vmatpush.bf16.msra.mxu0 %v3047
    %3150 = vmatpush.bf16.msra.mxu0 %v3046
    %3151 = vmatpush.bf16.msra.mxu0 %v3045
    %3152 = vmatpush.bf16.msra.mxu0 %v3044
    %3153 = vmatmul.bf16.gmra.mxu0 %v2739
    %v3154 = vpop.f32.mrf.mxu0
    %v3155 = vadd.f32 %v3142, %v3154
    %v3156 = vpop.f32.mrf.mxu0
    %3157 = vdwg.mxu0
    %3158 = vmatpush.bf16.msra.mxu0 %v3059
    %3159 = vmatpush.bf16.msra.mxu0 %v3058
    %3160 = vmatpush.bf16.msra.mxu0 %v3057
    %3161 = vmatpush.bf16.msra.mxu0 %v3056
    %3162 = vmatpush.bf16.msra.mxu0 %v3055
    %3163 = vmatpush.bf16.msra.mxu0 %v3054
    %3164 = vmatpush.bf16.msra.mxu0 %v3053
    %3165 = vmatpush.bf16.msra.mxu0 %v3052
    %3166 = vmatmul.bf16.gmra.mxu0 %v2740
    %v3167 = vpop.f32.mrf.mxu0
    %v3168 = vadd.f32 %v3155, %v3167
    %v3169 = vpop.f32.mrf.mxu0
    %3170 = vdwg.mxu0
    %3171 = vmatpush.bf16.msra.mxu0 %v3067
    %3172 = vmatpush.bf16.msra.mxu0 %v3066
    %3173 = vmatpush.bf16.msra.mxu0 %v3065
    %3174 = vmatpush.bf16.msra.mxu0 %v3064
    %3175 = vmatpush.bf16.msra.mxu0 %v3063
    %3176 = vmatpush.bf16.msra.mxu0 %v3062
    %3177 = vmatpush.bf16.msra.mxu0 %v3061
    %3178 = vmatpush.bf16.msra.mxu0 %v3060
    %3179 = vmatmul.bf16.gmra.mxu0 %v2741
    %v3180 = vpop.f32.mrf.mxu0
    %v3181 = vadd.f32 %v3168, %v3180
    %v3182 = vpop.f32.mrf.mxu0
    %3183 = vdwg.mxu0
    %3184 = vmatpush.bf16.msra.mxu0 %v3075
    %3185 = vmatpush.bf16.msra.mxu0 %v3074
    %3186 = vmatpush.bf16.msra.mxu0 %v3073
    %3187 = vmatpush.bf16.msra.mxu0 %v3072
    %3188 = vmatpush.bf16.msra.mxu0 %v3071
    %3189 = vmatpush.bf16.msra.mxu0 %v3070
    %3190 = vmatpush.bf16.msra.mxu0 %v3069
    %3191 = vmatpush.bf16.msra.mxu0 %v3068
    %3192 = vmatmul.bf16.gmra.mxu0 %v2742
    %v3193 = vpop.f32.mrf.mxu0
    %v3194 = vadd.f32 %v3181, %v3193
    %v3195 = vpop.f32.mrf.mxu0
    %3196 = vdwg.mxu0
    %3197 = vmatpush.bf16.msra.mxu0 %v3083
    %3198 = vmatpush.bf16.msra.mxu0 %v3082
    %3199 = vmatpush.bf16.msra.mxu0 %v3081
    %3200 = vmatpush.bf16.msra.mxu0 %v3080
    %3201 = vmatpush.bf16.msra.mxu0 %v3079
    %3202 = vmatpush.bf16.msra.mxu0 %v3078
    %3203 = vmatpush.bf16.msra.mxu0 %v3077
    %3204 = vmatpush.bf16.msra.mxu0 %v3076
    %3205 = vmatmul.bf16.gmra.mxu0 %v2743
    %v3206 = vpop.f32.mrf.mxu0
    %v3207 = vadd.f32 %v3194, %v3206
    %v3208 = vpop.f32.mrf.mxu0
    %3209 = vdwg.mxu0
    %3210 = vst [vmem:[#allocation8] sm:$0x3] %v3207
    // Predicated region
    $region34: #{tpu_custom_call.1} parent=1 // pred_check
      _
    $region35: #{tpu_custom_call.1} parent=1 // pred_check_branch
      %3212 = sbr.rel (0) target = $region37
    $region36: #{tpu_custom_call.1} parent=1 // pred_region
      %3214 = vsyncadd [#allocation4], 0
      %s3216 = sshll.u32 [#allocation8], 4
      %s3217 = int_to_ptr.vmem [resolvable:$true] %s3216
      %s3218 = sshll.u32 %s5, 4
      %s3219 = int_to_ptr.hbm [resolvable:$true] %s3218
      %3221 = dma.vmem_to_hbm [thread:$0]  %s3217, 32, %s3219, [#allocation4]
    $region37: #{tpu_custom_call.1} parent=1 // pred_fallthru
      _
    // Predicated region
    $region38: #{tpu_custom_call.1} parent=1 // pred_check
      _
    $region39: #{tpu_custom_call.1} parent=1 // pred_check_branch
      %3223 = sbr.rel (0) target = $region41
    $region40: #{tpu_custom_call.1} parent=1 // pred_region
      %3225 = dma.done [#allocation4], 32
    $region41: #{tpu_custom_call.1} parent=1 // pred_fallthru
      _
    %3226 = vsyncpa [#allocation3], 1
    %3227 = vsyncpa [#allocation6], 1
    %3228 = vsyncpa [#allocation4], 1

</llo_original>
